<compile_context>
chip_gen: v5e
topology: v5e:2x2
jax: 0.10.0
libtpu: 0.0.40
codegen_flags: <defaults>
</compile_context>

<pallas_src>
import jax
import jax.numpy as jnp
from jax import lax
from jax.experimental import pallas as pl
from jax.experimental.pallas import tpu as pltpu


def _make_oafilter_kernel(mxu_dtype):
    md = mxu_dtype

    def kernel(x_ref, w1_ref, w234_ref, w5_ref, w678_ref, w9t_ref, w1012t_ref,
               b_init_ref, b_end_ref, b_mid_ref, bn_ce_ref, bn_m_ref, out_ref):
        x = x_ref[...]                                    # (B, C, N) f32
        B, C, N = x.shape

        def conv_c(h, w, bias):
            # channel 1x1 conv: h (B, K, N), w (O, K), bias (O, 1) -> (B, O, N)
            wb = jnp.broadcast_to(w.astype(md), (B,) + w.shape)
            y = lax.dot_general(wb, h.astype(md),
                                dimension_numbers=(((2,), (1,)), ((0,), (0,))),
                                preferred_element_type=jnp.float32)
            return y + bias

        def conv_p(hf, wt, bias):
            # points 1x1 conv on the flattened rows: hf (B*C, K), wt (K, O),
            # bias (1, O) -> (B*C, O).  Single unbatched MXU matmul.
            y = lax.dot_general(hf.astype(md), wt.astype(md),
                                dimension_numbers=(((1,), (0,)), ((), ())),
                                preferred_element_type=jnp.float32)
            return y + bias

        def in_bn_relu(h, gamma, beta):
            # Fused InstanceNorm2d(eps=1e-3) -> BatchNorm2d(train, eps=1e-5) -> ReLU.
            mu_i = jnp.mean(h, axis=-1, keepdims=True)                   # (B, C, 1)
            var_i = jnp.mean((h - mu_i) ** 2, axis=-1, keepdims=True)    # (B, C, 1)
            inv_i = lax.rsqrt(var_i + 1e-3)
            # After IN, the per-(b,c) mean over N is 0, so the BN batch mean is 0 and
            # BN batch var[c] = mean_b( var_i / (var_i + eps_in) ).
            var_b = jnp.mean(var_i * inv_i * inv_i, axis=0, keepdims=True)  # (1, C, 1)
            scale = inv_i * lax.rsqrt(var_b + 1e-5) * gamma
            return jnp.maximum((h - mu_i) * scale + beta, 0.0)

        # ---- init chain + normalinit ----
        i1 = conv_c(x,  w1_ref[...],  b_init_ref[0])
        i2 = conv_c(i1, w234_ref[0],  b_init_ref[1])
        i3 = conv_c(i2, w234_ref[1],  b_init_ref[2])
        i4 = conv_c(i3, w234_ref[2],  b_init_ref[3])
        h = jnp.concatenate([i1, i2, i3, i4], axis=1)                     # (B, C, N)
        h = in_bn_relu(h, bn_ce_ref[0], bn_ce_ref[1])

        # ---- middle chain over the points axis (PyTorch transpose(1,2) is a no-op) --
        # Flatten (B, C, N) -> (B*C, N): leading-dim merge only, lane dim untouched,
        # so each hop is one plain (M, K) x (K, O) MXU matmul.
        hf = h.reshape(B * C, N)
        m1 = conv_p(hf, w9t_ref[...],  b_mid_ref[0])                      # (B*C, N/4)
        m2 = conv_p(m1, w1012t_ref[0], b_mid_ref[1])
        m3 = conv_p(m2, w1012t_ref[1], b_mid_ref[2])
        m4 = conv_p(m3, w1012t_ref[2], b_mid_ref[3])
        mid = jnp.concatenate([m1, m2, m3, m4], axis=-1)                  # (B*C, N)
        # BatchNorm2d(points): per-point stats over (B, C) == axis 0 of the flat view.
        mu_m = jnp.mean(mid, axis=0, keepdims=True)                       # (1, N)
        var_m = jnp.mean((mid - mu_m) ** 2, axis=0, keepdims=True)
        mid = (mid - mu_m) * lax.rsqrt(var_m + 1e-5) * bn_m_ref[0] + bn_m_ref[1]
        h = h + jnp.maximum(mid, 0.0).reshape(B, C, N)

        # ---- end chain + normalend + residual ----
        o1 = conv_c(h,  w5_ref[...],  b_end_ref[0])
        o2 = conv_c(o1, w678_ref[0],  b_end_ref[1])
        o3 = conv_c(o2, w678_ref[1],  b_end_ref[2])
        o4 = conv_c(o3, w678_ref[2],  b_end_ref[3])
        he = jnp.concatenate([o1, o2, o3, o4], axis=1)
        he = in_bn_relu(he, bn_ce_ref[2], bn_ce_ref[3])

        # TODO(synk): shot_cut (1x1 conv on x) for out_channels != channels is not
        # implemented; this covers the default out_channels == channels configuration.
        out_ref[...] = he + x

    return kernel


def oafilter_forward(x, p, mxu_dtype=jnp.bfloat16):
    """x: (B, channels, points, 1) NCHW  ->  (B, channels, points, 1)."""
    B, C, N, W = x.shape
    assert W == 1 and C % 4 == 0 and N % 4 == 0
    f32 = lambda a: jnp.asarray(a, jnp.float32)

    xu = f32(x[..., 0])                                            # (B, C, N)
    w1, w5 = f32(p["w1"]), f32(p["w5"])                            # (C//4, C)
    w234 = jnp.stack([f32(p["w2"]), f32(p["w3"]), f32(p["w4"])])   # (3, C//4, C//4)
    w678 = jnp.stack([f32(p["w6"]), f32(p["w7"]), f32(p["w8"])])
    # Points-convs: pre-transpose (free, wrapper-side) so the kernel RHS is canonical.
    w9t = f32(p["w9"]).T                                           # (N, N//4)
    w1012t = jnp.stack([f32(p["w10"]).T, f32(p["w11"]).T, f32(p["w12"]).T])
    b_init = jnp.stack([f32(p["b1"]), f32(p["b2"]), f32(p["b3"]), f32(p["b4"])])[:, :, None]
    b_end = jnp.stack([f32(p["b5"]), f32(p["b6"]), f32(p["b7"]), f32(p["b8"])])[:, :, None]
    b_mid = jnp.stack([f32(p["b9"]), f32(p["b10"]), f32(p["b11"]), f32(p["b12"])])[:, None, :]
    bn_ce = jnp.stack([f32(p["bn_init_gamma"]), f32(p["bn_init_beta"]),
                       f32(p["bn_end_gamma"]), f32(p["bn_end_beta"])])[:, :, None]
    bn_m = jnp.stack([f32(p["bn_mid_gamma"]), f32(p["bn_mid_beta"])])[:, None, :]

    out = pl.pallas_call(
        _make_oafilter_kernel(mxu_dtype),
        out_shape=jax.ShapeDtypeStruct((B, C, N), jnp.float32),
        in_specs=[pl.BlockSpec(memory_space=pltpu.MemorySpace.VMEM)] * 12,
        out_specs=pl.BlockSpec(memory_space=pltpu.MemorySpace.VMEM),
    )(xu, w1, w234, w5, w678, w9t, w1012t, b_init, b_end, b_mid, bn_ce, bn_m)

    # Kernel already emits the final NCHW(-minus-W) layout; just restore W == 1.
    return out[..., None]


def init_params(key, channels, points):
    C, C4, P, P4 = channels, channels // 4, points, points // 4
    ks = iter(jax.random.split(key, 32))
    w = lambda o, i: 0.1 * jax.random.normal(next(ks), (o, i), jnp.float32)
    b = lambda o: 0.05 * jax.random.normal(next(ks), (o,), jnp.float32)
    g = lambda n: 1.0 + 0.1 * jax.random.normal(next(ks), (n,), jnp.float32)
    z = lambda n: 0.1 * jax.random.normal(next(ks), (n,), jnp.float32)
    return dict(
        w1=w(C4, C), w2=w(C4, C4), w3=w(C4, C4), w4=w(C4, C4),
        w5=w(C4, C), w6=w(C4, C4), w7=w(C4, C4), w8=w(C4, C4),
        w9=w(P4, P), w10=w(P4, P4), w11=w(P4, P4), w12=w(P4, P4),
        b1=b(C4), b2=b(C4), b3=b(C4), b4=b(C4),
        b5=b(C4), b6=b(C4), b7=b(C4), b8=b(C4),
        b9=b(P4), b10=b(P4), b11=b(P4), b12=b(P4),
        bn_init_gamma=g(C), bn_init_beta=z(C),
        bn_mid_gamma=g(P), bn_mid_beta=z(P),
        bn_end_gamma=g(C), bn_end_beta=z(C),
    )


def _reference(x, p, mxu_dtype=jnp.float32):
    """Pure-JAX reference of the PyTorch forward (training-mode BN, affine-less IN)."""
    md = mxu_dtype

    def conv(h, w, bias):  # 1x1 Conv2d, NCHW
        y = jnp.einsum("oc,bchw->bohw", w.astype(md), h.astype(md),
                       preferred_element_type=jnp.float32, precision="highest")
        return y + bias[None, :, None, None]

    def inorm(h, eps=1e-3):  # InstanceNorm2d: per (b, c) over (H, W), affine=False
        mu = jnp.mean(h, axis=(2, 3), keepdims=True)
        var = jnp.mean((h - mu) ** 2, axis=(2, 3), keepdims=True)
        return (h - mu) / jnp.sqrt(var + eps)

    def bnorm(h, gamma, beta, eps=1e-5):  # BatchNorm2d training: per c over (B, H, W)
        mu = jnp.mean(h, axis=(0, 2, 3), keepdims=True)
        var = jnp.mean((h - mu) ** 2, axis=(0, 2, 3), keepdims=True)
        hn = (h - mu) / jnp.sqrt(var + eps)
        return hn * gamma[None, :, None, None] + beta[None, :, None, None]

    relu = lambda h: jnp.maximum(h, 0.0)

    i1 = conv(x, p["w1"], p["b1"]);  i2 = conv(i1, p["w2"], p["b2"])
    i3 = conv(i2, p["w3"], p["b3"]); i4 = conv(i3, p["w4"], p["b4"])
    out = jnp.concatenate([i1, i2, i3, i4], axis=1)
    out = relu(bnorm(inorm(out), p["bn_init_gamma"], p["bn_init_beta"]))

    out = jnp.transpose(out, (0, 2, 1, 3))          # (B, points, C, 1)
    m1 = conv(out, p["w9"], p["b9"]);  m2 = conv(m1, p["w10"], p["b10"])
    m3 = conv(m2, p["w11"], p["b11"]); m4 = conv(m3, p["w12"], p["b12"])
    mid = jnp.concatenate([m1, m2, m3, m4], axis=1)
    out = out + relu(bnorm(mid, p["bn_mid_gamma"], p["bn_mid_beta"]))
    out = jnp.transpose(out, (0, 2, 1, 3))          # (B, C, points, 1)

    o1 = conv(out, p["w5"], p["b5"]); o2 = conv(o1, p["w6"], p["b6"])
    o3 = conv(o2, p["w7"], p["b7"]);  o4 = conv(o3, p["w8"], p["b8"])
    out = jnp.concatenate([o1, o2, o3, o4], axis=1)
    out = relu(bnorm(inorm(out), p["bn_end_gamma"], p["bn_end_beta"]))
    return out + x                                  # shot_cut is None (oc == channels)


if __name__ == "__main__":
    B, C, N = 2, 32, 128        # batch, channels, points (W == 1 in NCHW)
    key = jax.random.PRNGKey(0)
    kx, kp = jax.random.split(key)
    x = jax.random.normal(kx, (B, C, N, 1), dtype=jnp.float32)
    params = init_params(kp, C, N)

    # 1) Exact-semantics check: f32 MXU inputs vs. f32 reference.
    ref_f32 = _reference(x, params, mxu_dtype=jnp.float32)
    out_f32 = jax.block_until_ready(oafilter_forward(x, params, mxu_dtype=jnp.float32))
    assert out_f32.shape == (B, C, N, 1), out_f32.shape
    err = float(jnp.max(jnp.abs(out_f32 - ref_f32)))
    assert jnp.allclose(out_f32, ref_f32, rtol=2e-3, atol=2e-3), err

    # 2) Performance configuration: bf16 MXU inputs / f32 accumulation, checked against
    #    a reference that quantizes the dot inputs identically.
    ref_bf16 = _reference(x, params, mxu_dtype=jnp.bfloat16)
    out_bf16 = jax.block_until_ready(oafilter_forward(x, params, mxu_dtype=jnp.bfloat16))
    err_bf = float(jnp.max(jnp.abs(out_bf16 - ref_bf16)))
    assert jnp.allclose(out_bf16, ref_bf16, rtol=1e-2, atol=1e-2), err_bf

    print("KERNEL_OK")
</pallas_src>

<mosaic_0001>
module attributes {stable_mosaic.version = 11 : i64} {
  func.func @kernel(%arg0: memref<2x32x128xf32, #tpu.memory_space<vmem>>, %arg1: memref<8x32xf32, #tpu.memory_space<vmem>>, %arg2: memref<3x8x8xf32, #tpu.memory_space<vmem>>, %arg3: memref<8x32xf32, #tpu.memory_space<vmem>>, %arg4: memref<3x8x8xf32, #tpu.memory_space<vmem>>, %arg5: memref<128x32xf32, #tpu.memory_space<vmem>>, %arg6: memref<3x32x32xf32, #tpu.memory_space<vmem>>, %arg7: memref<4x8x1xf32, #tpu.memory_space<vmem>>, %arg8: memref<4x8x1xf32, #tpu.memory_space<vmem>>, %arg9: memref<4x1x32xf32, #tpu.memory_space<vmem>>, %arg10: memref<4x32x1xf32, #tpu.memory_space<vmem>>, %arg11: memref<2x1x128xf32, #tpu.memory_space<vmem>>, %arg12: memref<2x32x128xf32, #tpu.memory_space<vmem>>) attributes {dimension_semantics = [], scalar_prefetch = 0 : i64, scratch_operands = 0 : i64, tpu.core_type = #tpu.core_type<tc>} {
    %c0 = arith.constant 0 : index
    %c0_0 = arith.constant 0 : index
    %c0_1 = arith.constant 0 : index
    %0 = vector.load %arg0[%c0, %c0_0, %c0_1] : memref<2x32x128xf32, #tpu.memory_space<vmem>>, vector<2x32x128xf32>
    %c0_2 = arith.constant 0 : index
    %c0_3 = arith.constant 0 : index
    %1 = vector.load %arg1[%c0_2, %c0_3] : memref<8x32xf32, #tpu.memory_space<vmem>>, vector<8x32xf32>
    %c0_4 = arith.constant 0 : index
    %c0_5 = arith.constant 0 : index
    %c0_6 = arith.constant 0 : index
    %2 = vector.load %arg7[%c0_4, %c0_5, %c0_6] : memref<4x8x1xf32, #tpu.memory_space<vmem>>, vector<1x8x1xf32>
    %3 = vector.shape_cast %2 : vector<1x8x1xf32> to vector<8x1xf32>
    %4 = vector.shape_cast %1 : vector<8x32xf32> to vector<1x8x32xf32>
    %5 = vector.broadcast %4 : vector<1x8x32xf32> to vector<2x8x32xf32>
    %cst = arith.constant dense<0.000000e+00> : vector<2x8x128xf32>
    %6 = tpu.matmul %5, %0, %cst {dimension_numbers = #tpu.dot_dimension_numbers<[2], [1], [1], [2], [0, 0, 0, 1, 1, 2], [0], [0]>} : vector<2x8x32xf32>, vector<2x32x128xf32>, vector<2x8x128xf32> -> vector<2x8x128xf32>
    %7 = vector.shape_cast %3 : vector<8x1xf32> to vector<1x8x1xf32>
    %8 = vector.broadcast %7 : vector<1x8x1xf32> to vector<2x8x128xf32>
    %9 = arith.addf %6, %8 : vector<2x8x128xf32>
    %c0_7 = arith.constant 0 : index
    %c0_8 = arith.constant 0 : index
    %c0_9 = arith.constant 0 : index
    %10 = vector.load %arg2[%c0_7, %c0_8, %c0_9] : memref<3x8x8xf32, #tpu.memory_space<vmem>>, vector<1x8x8xf32>
    %11 = vector.shape_cast %10 : vector<1x8x8xf32> to vector<8x8xf32>
    %c1 = arith.constant 1 : index
    %c0_10 = arith.constant 0 : index
    %c0_11 = arith.constant 0 : index
    %12 = vector.load %arg7[%c1, %c0_10, %c0_11] : memref<4x8x1xf32, #tpu.memory_space<vmem>>, vector<1x8x1xf32>
    %13 = vector.shape_cast %12 : vector<1x8x1xf32> to vector<8x1xf32>
    %14 = vector.shape_cast %11 : vector<8x8xf32> to vector<1x8x8xf32>
    %15 = vector.broadcast %14 : vector<1x8x8xf32> to vector<2x8x8xf32>
    %cst_12 = arith.constant dense<0.000000e+00> : vector<2x8x128xf32>
    %16 = tpu.matmul %15, %9, %cst_12 {dimension_numbers = #tpu.dot_dimension_numbers<[2], [1], [1], [2], [0, 0, 0, 1, 1, 2], [0], [0]>} : vector<2x8x8xf32>, vector<2x8x128xf32>, vector<2x8x128xf32> -> vector<2x8x128xf32>
    %17 = vector.shape_cast %13 : vector<8x1xf32> to vector<1x8x1xf32>
    %18 = vector.broadcast %17 : vector<1x8x1xf32> to vector<2x8x128xf32>
    %19 = arith.addf %16, %18 : vector<2x8x128xf32>
    %c1_13 = arith.constant 1 : index
    %c0_14 = arith.constant 0 : index
    %c0_15 = arith.constant 0 : index
    %20 = vector.load %arg2[%c1_13, %c0_14, %c0_15] : memref<3x8x8xf32, #tpu.memory_space<vmem>>, vector<1x8x8xf32>
    %21 = vector.shape_cast %20 : vector<1x8x8xf32> to vector<8x8xf32>
    %c2 = arith.constant 2 : index
    %c0_16 = arith.constant 0 : index
    %c0_17 = arith.constant 0 : index
    %22 = vector.load %arg7[%c2, %c0_16, %c0_17] : memref<4x8x1xf32, #tpu.memory_space<vmem>>, vector<1x8x1xf32>
    %23 = vector.shape_cast %22 : vector<1x8x1xf32> to vector<8x1xf32>
    %24 = vector.shape_cast %21 : vector<8x8xf32> to vector<1x8x8xf32>
    %25 = vector.broadcast %24 : vector<1x8x8xf32> to vector<2x8x8xf32>
    %cst_18 = arith.constant dense<0.000000e+00> : vector<2x8x128xf32>
    %26 = tpu.matmul %25, %19, %cst_18 {dimension_numbers = #tpu.dot_dimension_numbers<[2], [1], [1], [2], [0, 0, 0, 1, 1, 2], [0], [0]>} : vector<2x8x8xf32>, vector<2x8x128xf32>, vector<2x8x128xf32> -> vector<2x8x128xf32>
    %27 = vector.shape_cast %23 : vector<8x1xf32> to vector<1x8x1xf32>
    %28 = vector.broadcast %27 : vector<1x8x1xf32> to vector<2x8x128xf32>
    %29 = arith.addf %26, %28 : vector<2x8x128xf32>
    %c2_19 = arith.constant 2 : index
    %c0_20 = arith.constant 0 : index
    %c0_21 = arith.constant 0 : index
    %30 = vector.load %arg2[%c2_19, %c0_20, %c0_21] : memref<3x8x8xf32, #tpu.memory_space<vmem>>, vector<1x8x8xf32>
    %31 = vector.shape_cast %30 : vector<1x8x8xf32> to vector<8x8xf32>
    %c3 = arith.constant 3 : index
    %c0_22 = arith.constant 0 : index
    %c0_23 = arith.constant 0 : index
    %32 = vector.load %arg7[%c3, %c0_22, %c0_23] : memref<4x8x1xf32, #tpu.memory_space<vmem>>, vector<1x8x1xf32>
    %33 = vector.shape_cast %32 : vector<1x8x1xf32> to vector<8x1xf32>
    %34 = vector.shape_cast %31 : vector<8x8xf32> to vector<1x8x8xf32>
    %35 = vector.broadcast %34 : vector<1x8x8xf32> to vector<2x8x8xf32>
    %cst_24 = arith.constant dense<0.000000e+00> : vector<2x8x128xf32>
    %36 = tpu.matmul %35, %29, %cst_24 {dimension_numbers = #tpu.dot_dimension_numbers<[2], [1], [1], [2], [0, 0, 0, 1, 1, 2], [0], [0]>} : vector<2x8x8xf32>, vector<2x8x128xf32>, vector<2x8x128xf32> -> vector<2x8x128xf32>
    %37 = vector.shape_cast %33 : vector<8x1xf32> to vector<1x8x1xf32>
    %38 = vector.broadcast %37 : vector<1x8x1xf32> to vector<2x8x128xf32>
    %39 = arith.addf %36, %38 : vector<2x8x128xf32>
    %40 = tpu.concatenate %9, %19, %29, %39 in 1 : vector<2x8x128xf32>, vector<2x8x128xf32>, vector<2x8x128xf32>, vector<2x8x128xf32> -> vector<2x32x128xf32>
    %c0_25 = arith.constant 0 : index
    %c0_26 = arith.constant 0 : index
    %c0_27 = arith.constant 0 : index
    %41 = vector.load %arg10[%c0_25, %c0_26, %c0_27] : memref<4x32x1xf32, #tpu.memory_space<vmem>>, vector<1x32x1xf32>
    %42 = vector.shape_cast %41 : vector<1x32x1xf32> to vector<32x1xf32>
    %c1_28 = arith.constant 1 : index
    %c0_29 = arith.constant 0 : index
    %c0_30 = arith.constant 0 : index
    %43 = vector.load %arg10[%c1_28, %c0_29, %c0_30] : memref<4x32x1xf32, #tpu.memory_space<vmem>>, vector<1x32x1xf32>
    %44 = vector.shape_cast %43 : vector<1x32x1xf32> to vector<32x1xf32>
    %cst_31 = arith.constant dense<0.000000e+00> : vector<2x32xf32>
    %45 = vector.multi_reduction <add>, %40, %cst_31 [2] : vector<2x32x128xf32> to vector<2x32xf32>
    %46 = vector.shape_cast %45 : vector<2x32xf32> to vector<2x32x1xf32>
    %cst_32 = arith.constant 1.280000e+02 : f32
    %47 = vector.broadcast %cst_32 : f32 to vector<2x32x1xf32>
    %48 = arith.divf %46, %47 : vector<2x32x1xf32>
    %49 = vector.broadcast %48 : vector<2x32x1xf32> to vector<2x32x128xf32>
    %50 = arith.subf %40, %49 : vector<2x32x128xf32>
    %51 = arith.mulf %50, %50 : vector<2x32x128xf32>
    %cst_33 = arith.constant dense<0.000000e+00> : vector<2x32xf32>
    %52 = vector.multi_reduction <add>, %51, %cst_33 [2] : vector<2x32x128xf32> to vector<2x32xf32>
    %53 = vector.shape_cast %52 : vector<2x32xf32> to vector<2x32x1xf32>
    %cst_34 = arith.constant 1.280000e+02 : f32
    %54 = vector.broadcast %cst_34 : f32 to vector<2x32x1xf32>
    %55 = arith.divf %53, %54 : vector<2x32x1xf32>
    %cst_35 = arith.constant 1.000000e-03 : f32
    %56 = vector.broadcast %cst_35 : f32 to vector<2x32x1xf32>
    %57 = arith.addf %55, %56 : vector<2x32x1xf32>
    %58 = math.rsqrt %57 : vector<2x32x1xf32>
    %59 = arith.mulf %55, %58 : vector<2x32x1xf32>
    %60 = arith.mulf %59, %58 : vector<2x32x1xf32>
    %cst_36 = arith.constant dense<0.000000e+00> : vector<32x1xf32>
    %61 = vector.multi_reduction <add>, %60, %cst_36 [0] : vector<2x32x1xf32> to vector<32x1xf32>
    %62 = vector.shape_cast %61 : vector<32x1xf32> to vector<1x32x1xf32>
    %cst_37 = arith.constant 2.000000e+00 : f32
    %63 = vector.broadcast %cst_37 : f32 to vector<1x32x1xf32>
    %64 = arith.divf %62, %63 : vector<1x32x1xf32>
    %cst_38 = arith.constant 9.99999974E-6 : f32
    %65 = vector.broadcast %cst_38 : f32 to vector<1x32x1xf32>
    %66 = arith.addf %64, %65 : vector<1x32x1xf32>
    %67 = math.rsqrt %66 : vector<1x32x1xf32>
    %68 = vector.broadcast %67 : vector<1x32x1xf32> to vector<2x32x1xf32>
    %69 = arith.mulf %58, %68 : vector<2x32x1xf32>
    %70 = vector.shape_cast %42 : vector<32x1xf32> to vector<1x32x1xf32>
    %71 = vector.broadcast %70 : vector<1x32x1xf32> to vector<2x32x1xf32>
    %72 = arith.mulf %69, %71 : vector<2x32x1xf32>
    %73 = vector.broadcast %48 : vector<2x32x1xf32> to vector<2x32x128xf32>
    %74 = arith.subf %40, %73 : vector<2x32x128xf32>
    %75 = vector.broadcast %72 : vector<2x32x1xf32> to vector<2x32x128xf32>
    %76 = arith.mulf %74, %75 : vector<2x32x128xf32>
    %77 = vector.shape_cast %44 : vector<32x1xf32> to vector<1x32x1xf32>
    %78 = vector.broadcast %77 : vector<1x32x1xf32> to vector<2x32x128xf32>
    %79 = arith.addf %76, %78 : vector<2x32x128xf32>
    %cst_39 = arith.constant 0.000000e+00 : f32
    %80 = vector.broadcast %cst_39 : f32 to vector<2x32x128xf32>
    %81 = arith.maximumf %79, %80 : vector<2x32x128xf32>
    %82 = vector.shape_cast %81 : vector<2x32x128xf32> to vector<64x128xf32>
    %c0_40 = arith.constant 0 : index
    %c0_41 = arith.constant 0 : index
    %83 = vector.load %arg5[%c0_40, %c0_41] : memref<128x32xf32, #tpu.memory_space<vmem>>, vector<128x32xf32>
    %c0_42 = arith.constant 0 : index
    %c0_43 = arith.constant 0 : index
    %c0_44 = arith.constant 0 : index
    %84 = vector.load %arg9[%c0_42, %c0_43, %c0_44] : memref<4x1x32xf32, #tpu.memory_space<vmem>>, vector<1x1x32xf32>
    %85 = vector.shape_cast %84 : vector<1x1x32xf32> to vector<1x32xf32>
    %cst_45 = arith.constant dense<0.000000e+00> : vector<64x32xf32>
    %86 = tpu.matmul %82, %83, %cst_45 {dimension_numbers = #tpu.dot_dimension_numbers<[1], [0], [0], [1], [0, 0, 1, 1], [], []>} : vector<64x128xf32>, vector<128x32xf32>, vector<64x32xf32> -> vector<64x32xf32>
    %87 = vector.broadcast %85 : vector<1x32xf32> to vector<64x32xf32>
    %88 = arith.addf %86, %87 : vector<64x32xf32>
    %c0_46 = arith.constant 0 : index
    %c0_47 = arith.constant 0 : index
    %c0_48 = arith.constant 0 : index
    %89 = vector.load %arg6[%c0_46, %c0_47, %c0_48] : memref<3x32x32xf32, #tpu.memory_space<vmem>>, vector<1x32x32xf32>
    %90 = vector.shape_cast %89 : vector<1x32x32xf32> to vector<32x32xf32>
    %c1_49 = arith.constant 1 : index
    %c0_50 = arith.constant 0 : index
    %c0_51 = arith.constant 0 : index
    %91 = vector.load %arg9[%c1_49, %c0_50, %c0_51] : memref<4x1x32xf32, #tpu.memory_space<vmem>>, vector<1x1x32xf32>
    %92 = vector.shape_cast %91 : vector<1x1x32xf32> to vector<1x32xf32>
    %cst_52 = arith.constant dense<0.000000e+00> : vector<64x32xf32>
    %93 = tpu.matmul %88, %90, %cst_52 {dimension_numbers = #tpu.dot_dimension_numbers<[1], [0], [0], [1], [0, 0, 1, 1], [], []>} : vector<64x32xf32>, vector<32x32xf32>, vector<64x32xf32> -> vector<64x32xf32>
    %94 = vector.broadcast %92 : vector<1x32xf32> to vector<64x32xf32>
    %95 = arith.addf %93, %94 : vector<64x32xf32>
    %c1_53 = arith.constant 1 : index
    %c0_54 = arith.constant 0 : index
    %c0_55 = arith.constant 0 : index
    %96 = vector.load %arg6[%c1_53, %c0_54, %c0_55] : memref<3x32x32xf32, #tpu.memory_space<vmem>>, vector<1x32x32xf32>
    %97 = vector.shape_cast %96 : vector<1x32x32xf32> to vector<32x32xf32>
    %c2_56 = arith.constant 2 : index
    %c0_57 = arith.constant 0 : index
    %c0_58 = arith.constant 0 : index
    %98 = vector.load %arg9[%c2_56, %c0_57, %c0_58] : memref<4x1x32xf32, #tpu.memory_space<vmem>>, vector<1x1x32xf32>
    %99 = vector.shape_cast %98 : vector<1x1x32xf32> to vector<1x32xf32>
    %cst_59 = arith.constant dense<0.000000e+00> : vector<64x32xf32>
    %100 = tpu.matmul %95, %97, %cst_59 {dimension_numbers = #tpu.dot_dimension_numbers<[1], [0], [0], [1], [0, 0, 1, 1], [], []>} : vector<64x32xf32>, vector<32x32xf32>, vector<64x32xf32> -> vector<64x32xf32>
    %101 = vector.broadcast %99 : vector<1x32xf32> to vector<64x32xf32>
    %102 = arith.addf %100, %101 : vector<64x32xf32>
    %c2_60 = arith.constant 2 : index
    %c0_61 = arith.constant 0 : index
    %c0_62 = arith.constant 0 : index
    %103 = vector.load %arg6[%c2_60, %c0_61, %c0_62] : memref<3x32x32xf32, #tpu.memory_space<vmem>>, vector<1x32x32xf32>
    %104 = vector.shape_cast %103 : vector<1x32x32xf32> to vector<32x32xf32>
    %c3_63 = arith.constant 3 : index
    %c0_64 = arith.constant 0 : index
    %c0_65 = arith.constant 0 : index
    %105 = vector.load %arg9[%c3_63, %c0_64, %c0_65] : memref<4x1x32xf32, #tpu.memory_space<vmem>>, vector<1x1x32xf32>
    %106 = vector.shape_cast %105 : vector<1x1x32xf32> to vector<1x32xf32>
    %cst_66 = arith.constant dense<0.000000e+00> : vector<64x32xf32>
    %107 = tpu.matmul %102, %104, %cst_66 {dimension_numbers = #tpu.dot_dimension_numbers<[1], [0], [0], [1], [0, 0, 1, 1], [], []>} : vector<64x32xf32>, vector<32x32xf32>, vector<64x32xf32> -> vector<64x32xf32>
    %108 = vector.broadcast %106 : vector<1x32xf32> to vector<64x32xf32>
    %109 = arith.addf %107, %108 : vector<64x32xf32>
    %110 = tpu.concatenate %88, %95, %102, %109 in 1 : vector<64x32xf32>, vector<64x32xf32>, vector<64x32xf32>, vector<64x32xf32> -> vector<64x128xf32>
    %cst_67 = arith.constant dense<0.000000e+00> : vector<128xf32>
    %111 = vector.multi_reduction <add>, %110, %cst_67 [0] : vector<64x128xf32> to vector<128xf32>
    %112 = vector.shape_cast %111 : vector<128xf32> to vector<1x128xf32>
    %cst_68 = arith.constant 6.400000e+01 : f32
    %113 = vector.broadcast %cst_68 : f32 to vector<1x128xf32>
    %114 = arith.divf %112, %113 : vector<1x128xf32>
    %115 = vector.broadcast %114 : vector<1x128xf32> to vector<64x128xf32>
    %116 = arith.subf %110, %115 : vector<64x128xf32>
    %117 = arith.mulf %116, %116 : vector<64x128xf32>
    %cst_69 = arith.constant dense<0.000000e+00> : vector<128xf32>
    %118 = vector.multi_reduction <add>, %117, %cst_69 [0] : vector<64x128xf32> to vector<128xf32>
    %119 = vector.shape_cast %118 : vector<128xf32> to vector<1x128xf32>
    %cst_70 = arith.constant 6.400000e+01 : f32
    %120 = vector.broadcast %cst_70 : f32 to vector<1x128xf32>
    %121 = arith.divf %119, %120 : vector<1x128xf32>
    %122 = vector.broadcast %114 : vector<1x128xf32> to vector<64x128xf32>
    %123 = arith.subf %110, %122 : vector<64x128xf32>
    %cst_71 = arith.constant 9.99999974E-6 : f32
    %124 = vector.broadcast %cst_71 : f32 to vector<1x128xf32>
    %125 = arith.addf %121, %124 : vector<1x128xf32>
    %126 = math.rsqrt %125 : vector<1x128xf32>
    %127 = vector.broadcast %126 : vector<1x128xf32> to vector<64x128xf32>
    %128 = arith.mulf %123, %127 : vector<64x128xf32>
    %c0_72 = arith.constant 0 : index
    %c0_73 = arith.constant 0 : index
    %c0_74 = arith.constant 0 : index
    %129 = vector.load %arg11[%c0_72, %c0_73, %c0_74] : memref<2x1x128xf32, #tpu.memory_space<vmem>>, vector<1x1x128xf32>
    %130 = vector.shape_cast %129 : vector<1x1x128xf32> to vector<1x128xf32>
    %131 = vector.broadcast %130 : vector<1x128xf32> to vector<64x128xf32>
    %132 = arith.mulf %128, %131 : vector<64x128xf32>
    %c1_75 = arith.constant 1 : index
    %c0_76 = arith.constant 0 : index
    %c0_77 = arith.constant 0 : index
    %133 = vector.load %arg11[%c1_75, %c0_76, %c0_77] : memref<2x1x128xf32, #tpu.memory_space<vmem>>, vector<1x1x128xf32>
    %134 = vector.shape_cast %133 : vector<1x1x128xf32> to vector<1x128xf32>
    %135 = vector.broadcast %134 : vector<1x128xf32> to vector<64x128xf32>
    %136 = arith.addf %132, %135 : vector<64x128xf32>
    %cst_78 = arith.constant 0.000000e+00 : f32
    %137 = vector.broadcast %cst_78 : f32 to vector<64x128xf32>
    %138 = arith.maximumf %136, %137 : vector<64x128xf32>
    %139 = vector.shape_cast %138 : vector<64x128xf32> to vector<2x32x128xf32>
    %140 = arith.addf %81, %139 : vector<2x32x128xf32>
    %c0_79 = arith.constant 0 : index
    %c0_80 = arith.constant 0 : index
    %141 = vector.load %arg3[%c0_79, %c0_80] : memref<8x32xf32, #tpu.memory_space<vmem>>, vector<8x32xf32>
    %c0_81 = arith.constant 0 : index
    %c0_82 = arith.constant 0 : index
    %c0_83 = arith.constant 0 : index
    %142 = vector.load %arg8[%c0_81, %c0_82, %c0_83] : memref<4x8x1xf32, #tpu.memory_space<vmem>>, vector<1x8x1xf32>
    %143 = vector.shape_cast %142 : vector<1x8x1xf32> to vector<8x1xf32>
    %144 = vector.shape_cast %141 : vector<8x32xf32> to vector<1x8x32xf32>
    %145 = vector.broadcast %144 : vector<1x8x32xf32> to vector<2x8x32xf32>
    %cst_84 = arith.constant dense<0.000000e+00> : vector<2x8x128xf32>
    %146 = tpu.matmul %145, %140, %cst_84 {dimension_numbers = #tpu.dot_dimension_numbers<[2], [1], [1], [2], [0, 0, 0, 1, 1, 2], [0], [0]>} : vector<2x8x32xf32>, vector<2x32x128xf32>, vector<2x8x128xf32> -> vector<2x8x128xf32>
    %147 = vector.shape_cast %143 : vector<8x1xf32> to vector<1x8x1xf32>
    %148 = vector.broadcast %147 : vector<1x8x1xf32> to vector<2x8x128xf32>
    %149 = arith.addf %146, %148 : vector<2x8x128xf32>
    %c0_85 = arith.constant 0 : index
    %c0_86 = arith.constant 0 : index
    %c0_87 = arith.constant 0 : index
    %150 = vector.load %arg4[%c0_85, %c0_86, %c0_87] : memref<3x8x8xf32, #tpu.memory_space<vmem>>, vector<1x8x8xf32>
    %151 = vector.shape_cast %150 : vector<1x8x8xf32> to vector<8x8xf32>
    %c1_88 = arith.constant 1 : index
    %c0_89 = arith.constant 0 : index
    %c0_90 = arith.constant 0 : index
    %152 = vector.load %arg8[%c1_88, %c0_89, %c0_90] : memref<4x8x1xf32, #tpu.memory_space<vmem>>, vector<1x8x1xf32>
    %153 = vector.shape_cast %152 : vector<1x8x1xf32> to vector<8x1xf32>
    %154 = vector.shape_cast %151 : vector<8x8xf32> to vector<1x8x8xf32>
    %155 = vector.broadcast %154 : vector<1x8x8xf32> to vector<2x8x8xf32>
    %cst_91 = arith.constant dense<0.000000e+00> : vector<2x8x128xf32>
    %156 = tpu.matmul %155, %149, %cst_91 {dimension_numbers = #tpu.dot_dimension_numbers<[2], [1], [1], [2], [0, 0, 0, 1, 1, 2], [0], [0]>} : vector<2x8x8xf32>, vector<2x8x128xf32>, vector<2x8x128xf32> -> vector<2x8x128xf32>
    %157 = vector.shape_cast %153 : vector<8x1xf32> to vector<1x8x1xf32>
    %158 = vector.broadcast %157 : vector<1x8x1xf32> to vector<2x8x128xf32>
    %159 = arith.addf %156, %158 : vector<2x8x128xf32>
    %c1_92 = arith.constant 1 : index
    %c0_93 = arith.constant 0 : index
    %c0_94 = arith.constant 0 : index
    %160 = vector.load %arg4[%c1_92, %c0_93, %c0_94] : memref<3x8x8xf32, #tpu.memory_space<vmem>>, vector<1x8x8xf32>
    %161 = vector.shape_cast %160 : vector<1x8x8xf32> to vector<8x8xf32>
    %c2_95 = arith.constant 2 : index
    %c0_96 = arith.constant 0 : index
    %c0_97 = arith.constant 0 : index
    %162 = vector.load %arg8[%c2_95, %c0_96, %c0_97] : memref<4x8x1xf32, #tpu.memory_space<vmem>>, vector<1x8x1xf32>
    %163 = vector.shape_cast %162 : vector<1x8x1xf32> to vector<8x1xf32>
    %164 = vector.shape_cast %161 : vector<8x8xf32> to vector<1x8x8xf32>
    %165 = vector.broadcast %164 : vector<1x8x8xf32> to vector<2x8x8xf32>
    %cst_98 = arith.constant dense<0.000000e+00> : vector<2x8x128xf32>
    %166 = tpu.matmul %165, %159, %cst_98 {dimension_numbers = #tpu.dot_dimension_numbers<[2], [1], [1], [2], [0, 0, 0, 1, 1, 2], [0], [0]>} : vector<2x8x8xf32>, vector<2x8x128xf32>, vector<2x8x128xf32> -> vector<2x8x128xf32>
    %167 = vector.shape_cast %163 : vector<8x1xf32> to vector<1x8x1xf32>
    %168 = vector.broadcast %167 : vector<1x8x1xf32> to vector<2x8x128xf32>
    %169 = arith.addf %166, %168 : vector<2x8x128xf32>
    %c2_99 = arith.constant 2 : index
    %c0_100 = arith.constant 0 : index
    %c0_101 = arith.constant 0 : index
    %170 = vector.load %arg4[%c2_99, %c0_100, %c0_101] : memref<3x8x8xf32, #tpu.memory_space<vmem>>, vector<1x8x8xf32>
    %171 = vector.shape_cast %170 : vector<1x8x8xf32> to vector<8x8xf32>
    %c3_102 = arith.constant 3 : index
    %c0_103 = arith.constant 0 : index
    %c0_104 = arith.constant 0 : index
    %172 = vector.load %arg8[%c3_102, %c0_103, %c0_104] : memref<4x8x1xf32, #tpu.memory_space<vmem>>, vector<1x8x1xf32>
    %173 = vector.shape_cast %172 : vector<1x8x1xf32> to vector<8x1xf32>
    %174 = vector.shape_cast %171 : vector<8x8xf32> to vector<1x8x8xf32>
    %175 = vector.broadcast %174 : vector<1x8x8xf32> to vector<2x8x8xf32>
    %cst_105 = arith.constant dense<0.000000e+00> : vector<2x8x128xf32>
    %176 = tpu.matmul %175, %169, %cst_105 {dimension_numbers = #tpu.dot_dimension_numbers<[2], [1], [1], [2], [0, 0, 0, 1, 1, 2], [0], [0]>} : vector<2x8x8xf32>, vector<2x8x128xf32>, vector<2x8x128xf32> -> vector<2x8x128xf32>
    %177 = vector.shape_cast %173 : vector<8x1xf32> to vector<1x8x1xf32>
    %178 = vector.broadcast %177 : vector<1x8x1xf32> to vector<2x8x128xf32>
    %179 = arith.addf %176, %178 : vector<2x8x128xf32>
    %180 = tpu.concatenate %149, %159, %169, %179 in 1 : vector<2x8x128xf32>, vector<2x8x128xf32>, vector<2x8x128xf32>, vector<2x8x128xf32> -> vector<2x32x128xf32>
    %c2_106 = arith.constant 2 : index
    %c0_107 = arith.constant 0 : index
    %c0_108 = arith.constant 0 : index
    %181 = vector.load %arg10[%c2_106, %c0_107, %c0_108] : memref<4x32x1xf32, #tpu.memory_space<vmem>>, vector<1x32x1xf32>
    %182 = vector.shape_cast %181 : vector<1x32x1xf32> to vector<32x1xf32>
    %c3_109 = arith.constant 3 : index
    %c0_110 = arith.constant 0 : index
    %c0_111 = arith.constant 0 : index
    %183 = vector.load %arg10[%c3_109, %c0_110, %c0_111] : memref<4x32x1xf32, #tpu.memory_space<vmem>>, vector<1x32x1xf32>
    %184 = vector.shape_cast %183 : vector<1x32x1xf32> to vector<32x1xf32>
    %cst_112 = arith.constant dense<0.000000e+00> : vector<2x32xf32>
    %185 = vector.multi_reduction <add>, %180, %cst_112 [2] : vector<2x32x128xf32> to vector<2x32xf32>
    %186 = vector.shape_cast %185 : vector<2x32xf32> to vector<2x32x1xf32>
    %cst_113 = arith.constant 1.280000e+02 : f32
    %187 = vector.broadcast %cst_113 : f32 to vector<2x32x1xf32>
    %188 = arith.divf %186, %187 : vector<2x32x1xf32>
    %189 = vector.broadcast %188 : vector<2x32x1xf32> to vector<2x32x128xf32>
    %190 = arith.subf %180, %189 : vector<2x32x128xf32>
    %191 = arith.mulf %190, %190 : vector<2x32x128xf32>
    %cst_114 = arith.constant dense<0.000000e+00> : vector<2x32xf32>
    %192 = vector.multi_reduction <add>, %191, %cst_114 [2] : vector<2x32x128xf32> to vector<2x32xf32>
    %193 = vector.shape_cast %192 : vector<2x32xf32> to vector<2x32x1xf32>
    %cst_115 = arith.constant 1.280000e+02 : f32
    %194 = vector.broadcast %cst_115 : f32 to vector<2x32x1xf32>
    %195 = arith.divf %193, %194 : vector<2x32x1xf32>
    %cst_116 = arith.constant 1.000000e-03 : f32
    %196 = vector.broadcast %cst_116 : f32 to vector<2x32x1xf32>
    %197 = arith.addf %195, %196 : vector<2x32x1xf32>
    %198 = math.rsqrt %197 : vector<2x32x1xf32>
    %199 = arith.mulf %195, %198 : vector<2x32x1xf32>
    %200 = arith.mulf %199, %198 : vector<2x32x1xf32>
    %cst_117 = arith.constant dense<0.000000e+00> : vector<32x1xf32>
    %201 = vector.multi_reduction <add>, %200, %cst_117 [0] : vector<2x32x1xf32> to vector<32x1xf32>
    %202 = vector.shape_cast %201 : vector<32x1xf32> to vector<1x32x1xf32>
    %cst_118 = arith.constant 2.000000e+00 : f32
    %203 = vector.broadcast %cst_118 : f32 to vector<1x32x1xf32>
    %204 = arith.divf %202, %203 : vector<1x32x1xf32>
    %cst_119 = arith.constant 9.99999974E-6 : f32
    %205 = vector.broadcast %cst_119 : f32 to vector<1x32x1xf32>
    %206 = arith.addf %204, %205 : vector<1x32x1xf32>
    %207 = math.rsqrt %206 : vector<1x32x1xf32>
    %208 = vector.broadcast %207 : vector<1x32x1xf32> to vector<2x32x1xf32>
    %209 = arith.mulf %198, %208 : vector<2x32x1xf32>
    %210 = vector.shape_cast %182 : vector<32x1xf32> to vector<1x32x1xf32>
    %211 = vector.broadcast %210 : vector<1x32x1xf32> to vector<2x32x1xf32>
    %212 = arith.mulf %209, %211 : vector<2x32x1xf32>
    %213 = vector.broadcast %188 : vector<2x32x1xf32> to vector<2x32x128xf32>
    %214 = arith.subf %180, %213 : vector<2x32x128xf32>
    %215 = vector.broadcast %212 : vector<2x32x1xf32> to vector<2x32x128xf32>
    %216 = arith.mulf %214, %215 : vector<2x32x128xf32>
    %217 = vector.shape_cast %184 : vector<32x1xf32> to vector<1x32x1xf32>
    %218 = vector.broadcast %217 : vector<1x32x1xf32> to vector<2x32x128xf32>
    %219 = arith.addf %216, %218 : vector<2x32x128xf32>
    %cst_120 = arith.constant 0.000000e+00 : f32
    %220 = vector.broadcast %cst_120 : f32 to vector<2x32x128xf32>
    %221 = arith.maximumf %219, %220 : vector<2x32x128xf32>
    %222 = arith.addf %221, %0 : vector<2x32x128xf32>
    %c0_121 = arith.constant 0 : index
    %c0_122 = arith.constant 0 : index
    %c0_123 = arith.constant 0 : index
    %223 = vector.load %arg12[%c0_121, %c0_122, %c0_123] : memref<2x32x128xf32, #tpu.memory_space<vmem>>, vector<2x32x128xf32>
    tpu.vector_store %arg12[%c0_121, %c0_122, %c0_123], %222 {strides = array<i32>} : memref<2x32x128xf32, #tpu.memory_space<vmem>>, vector<2x32x128xf32>,
    return
  }
}

</mosaic_0001>

<llo_original>
// kernel: tpu_custom_call.1
$region0: #{tpu_custom_call.1}
  #allocation0 [shape = 'u32[]', space=smem, size = 0x4, offset = 0x4, fixed_abs, tag = 'smem constant byte address 0x4 - core index']
  #allocation1 [shape = 'u32[72,128]{1,0:T(1,128)}', space=vmem, size = 0x9000, scoped, tag = 'internal scratch']
  %s0 = inlined_call_operand.vmem [shape: f32[2,32,128], index: 0, kind: input, shape index: {}]
  %s1 = inlined_call_operand.vmem [shape: f32[8,32], index: 1, kind: input, shape index: {}]
  %s2 = inlined_call_operand.vmem [shape: f32[3,8,8], index: 2, kind: input, shape index: {}]
  %s3 = inlined_call_operand.vmem [shape: f32[8,32], index: 3, kind: input, shape index: {}]
  %s4 = inlined_call_operand.vmem [shape: f32[3,8,8], index: 4, kind: input, shape index: {}]
  %s5 = inlined_call_operand.vmem [shape: f32[128,32], index: 5, kind: input, shape index: {}]
  %s6 = inlined_call_operand.vmem [shape: f32[3,32,32], index: 6, kind: input, shape index: {}]
  %s7 = inlined_call_operand.vmem [shape: f32[4,8,1], index: 7, kind: input, shape index: {}]
  %s8 = inlined_call_operand.vmem [shape: f32[4,8,1], index: 8, kind: input, shape index: {}]
  %s9 = inlined_call_operand.vmem [shape: f32[4,1,32], index: 9, kind: input, shape index: {}]
  %s10 = inlined_call_operand.vmem [shape: f32[4,32,1], index: 10, kind: input, shape index: {}]
  %s11 = inlined_call_operand.vmem [shape: f32[2,1,128], index: 11, kind: input, shape index: {}]
  %s12 = inlined_call_operand.hbm [shape: f32[2,32,128], index: 12, kind: output, shape index: {}]
  %s13 = sld [smem:[#allocation0]]
  $region58: #{tpu_custom_call.1} parent=0
    _
  %s15 = ssub.s32 1, %s13
  %s16 = scalar_select 0, %s15, %s13
  $region1: #{tpu_custom_call.1} parent=0
    #allocation2 [shape = 'u8[32768]{0}', space=vmem, size = 0x8000, scoped, tag = 'output window, operand 0, single buffered']
    #allocation3 [shape = 's32[1]{0}', space=sflag, size = 0x4, scoped, tag = 'scoped memory for tpu_custom_call.1']
    %17 = vsyncpa [#allocation3], 0
    // Predicated region
    $region2: #{tpu_custom_call.1} parent=1 // pred_check
      _
    $region3: #{tpu_custom_call.1} parent=1 // pred_check_branch
      %19 = sbr.rel (0) target = $region5
    $region4: #{tpu_custom_call.1} parent=1 // pred_region
      _
    $region5: #{tpu_custom_call.1} parent=1 // pred_fallthru
      _
    // Predicated region
    $region6: #{tpu_custom_call.1} parent=1 // pred_check
      _
    $region7: #{tpu_custom_call.1} parent=1 // pred_check_branch
      %21 = sbr.rel (0) target = $region9
    $region8: #{tpu_custom_call.1} parent=1 // pred_region
      _
    $region9: #{tpu_custom_call.1} parent=1 // pred_fallthru
      _
    // Predicated region
    $region10: #{tpu_custom_call.1} parent=1 // pred_check
      _
    $region11: #{tpu_custom_call.1} parent=1 // pred_check_branch
      %23 = sbr.rel (0) target = $region13
    $region12: #{tpu_custom_call.1} parent=1 // pred_region
      _
    $region13: #{tpu_custom_call.1} parent=1 // pred_fallthru
      _
    // Predicated region
    $region14: #{tpu_custom_call.1} parent=1 // pred_check
      _
    $region15: #{tpu_custom_call.1} parent=1 // pred_check_branch
      %25 = sbr.rel (0) target = $region17
    $region16: #{tpu_custom_call.1} parent=1 // pred_region
      _
    $region17: #{tpu_custom_call.1} parent=1 // pred_fallthru
      _
    // Predicated region
    $region18: #{tpu_custom_call.1} parent=1 // pred_check
      _
    $region19: #{tpu_custom_call.1} parent=1 // pred_check_branch
      %27 = sbr.rel (0) target = $region21
    $region20: #{tpu_custom_call.1} parent=1 // pred_region
      _
    $region21: #{tpu_custom_call.1} parent=1 // pred_fallthru
      _
    // Predicated region
    $region22: #{tpu_custom_call.1} parent=1 // pred_check
      _
    $region23: #{tpu_custom_call.1} parent=1 // pred_check_branch
      %29 = sbr.rel (0) target = $region25
    $region24: #{tpu_custom_call.1} parent=1 // pred_region
      _
    $region25: #{tpu_custom_call.1} parent=1 // pred_fallthru
      _
    // Predicated region
    $region26: #{tpu_custom_call.1} parent=1 // pred_check
      _
    $region27: #{tpu_custom_call.1} parent=1 // pred_check_branch
      %31 = sbr.rel (0) target = $region29
    $region28: #{tpu_custom_call.1} parent=1 // pred_region
      _
    $region29: #{tpu_custom_call.1} parent=1 // pred_fallthru
      _
    // Predicated region
    $region30: #{tpu_custom_call.1} parent=1 // pred_check
      _
    $region31: #{tpu_custom_call.1} parent=1 // pred_check_branch
      %33 = sbr.rel (0) target = $region33
    $region32: #{tpu_custom_call.1} parent=1 // pred_region
      _
    $region33: #{tpu_custom_call.1} parent=1 // pred_fallthru
      _
    // Predicated region
    $region34: #{tpu_custom_call.1} parent=1 // pred_check
      _
    $region35: #{tpu_custom_call.1} parent=1 // pred_check_branch
      %35 = sbr.rel (0) target = $region37
    $region36: #{tpu_custom_call.1} parent=1 // pred_region
      _
    $region37: #{tpu_custom_call.1} parent=1 // pred_fallthru
      _
    // Predicated region
    $region38: #{tpu_custom_call.1} parent=1 // pred_check
      _
    $region39: #{tpu_custom_call.1} parent=1 // pred_check_branch
      %37 = sbr.rel (0) target = $region41
    $region40: #{tpu_custom_call.1} parent=1 // pred_region
      _
    $region41: #{tpu_custom_call.1} parent=1 // pred_fallthru
      _
    // Predicated region
    $region42: #{tpu_custom_call.1} parent=1 // pred_check
      _
    $region43: #{tpu_custom_call.1} parent=1 // pred_check_branch
      %39 = sbr.rel (0) target = $region45
    $region44: #{tpu_custom_call.1} parent=1 // pred_region
      _
    $region45: #{tpu_custom_call.1} parent=1 // pred_fallthru
      _
    // Predicated region
    $region46: #{tpu_custom_call.1} parent=1 // pred_check
      _
    $region47: #{tpu_custom_call.1} parent=1 // pred_check_branch
      %41 = sbr.rel (0) target = $region49
    $region48: #{tpu_custom_call.1} parent=1 // pred_region
      _
    $region49: #{tpu_custom_call.1} parent=1 // pred_fallthru
      _
    %v42 = vld [vmem:[%s0] sm:$0xff]
    %v43 = vld [vmem:[%s0 + $0x8] sm:$0xff]
    %v44 = vld [vmem:[%s0 + $0x10] sm:$0xff]
    %v45 = vld [vmem:[%s0 + $0x18] sm:$0xff]
    %v46 = vld [vmem:[%s0 + $0x20] sm:$0xff]
    %v47 = vld [vmem:[%s0 + $0x28] sm:$0xff]
    %v48 = vld [vmem:[%s0 + $0x30] sm:$0xff]
    %v49 = vld [vmem:[%s0 + $0x38] sm:$0xff]
    %v50 = vld [vmem:[%s1] sm:$0xff]
    %v51 = vld [vmem:[%s7] sm:$0xff]
    %53 = vset.pattern.permute.xlu0 0
    %54 = vperm.xlu0 %53, %v51
    %v55 = vpop.permute.xlu0 %54
    %vm57 = vcmask 261120
    %v59 = vsel %vm57, %v50, 0
    %61 = vmatpush.msra.mxu0 0.0
    %62 = vmatpush.msra.mxu0 0.0
    %63 = vmatpush.msra.mxu0 0.0
    %64 = vmatpush.msra.mxu0 0.0
    %65 = vmatpush.msra.mxu0 0.0
    %66 = vmatpush.msra.mxu0 0.0
    %67 = vmatpush.msra.mxu0 0.0
    %68 = vmatpush.msra.mxu0 0.0
    %69 = vmatpush.msra.mxu0 0.0
    %70 = vmatpush.msra.mxu0 0.0
    %71 = vmatpush.msra.mxu0 0.0
    %72 = vmatpush.msra.mxu0 0.0
    %73 = vmatpush.msra.mxu0 %v45
    %74 = vmatpush.msra.mxu0 %v44
    %75 = vmatpush.msra.mxu0 %v43
    %76 = vmatpush.msra.mxu0 %v42
    %77 = vmatmul.f32.gmra.mxu0 %v59
    %v78 = vpop.f32.mrf.mxu0
    %v79 = vadd.f32 %v55, %v78
    %80 = vdwg.mxu0
    %81 = vmatpush.msra.mxu0 0.0
    %82 = vmatpush.msra.mxu0 0.0
    %83 = vmatpush.msra.mxu0 0.0
    %84 = vmatpush.msra.mxu0 0.0
    %85 = vmatpush.msra.mxu0 0.0
    %86 = vmatpush.msra.mxu0 0.0
    %87 = vmatpush.msra.mxu0 0.0
    %88 = vmatpush.msra.mxu0 0.0
    %89 = vmatpush.msra.mxu0 0.0
    %90 = vmatpush.msra.mxu0 0.0
    %91 = vmatpush.msra.mxu0 0.0
    %92 = vmatpush.msra.mxu0 0.0
    %93 = vmatpush.msra.mxu0 %v49
    %94 = vmatpush.msra.mxu0 %v48
    %95 = vmatpush.msra.mxu0 %v47
    %96 = vmatpush.msra.mxu0 %v46
    %97 = vmatmul.f32.gmra.mxu0 %v59
    %v98 = vpop.f32.mrf.mxu0
    %v99 = vadd.f32 %v55, %v98
    %100 = vdwg.mxu0
    %v101 = vld [vmem:[%s2] sm:$0xff]
    %s102 = scalar_lea.vmem %s7, 8
    %v103 = vld [vmem:[%s102] sm:$0xff]
    %105 = vset.pattern.permute.xlu0 0
    %106 = vperm.xlu0 %105, %v103
    %v107 = vpop.permute.xlu0 %106
    %vm109 = vcmask 64512
    %v111 = vsel %vm109, %v101, 0
    %113 = vmatpush.msra.mxu0 0.0
    %114 = vmatpush.msra.mxu0 0.0
    %115 = vmatpush.msra.mxu0 0.0
    %116 = vmatpush.msra.mxu0 0.0
    %117 = vmatpush.msra.mxu0 0.0
    %118 = vmatpush.msra.mxu0 0.0
    %119 = vmatpush.msra.mxu0 0.0
    %120 = vmatpush.msra.mxu0 0.0
    %121 = vmatpush.msra.mxu0 0.0
    %122 = vmatpush.msra.mxu0 0.0
    %123 = vmatpush.msra.mxu0 0.0
    %124 = vmatpush.msra.mxu0 0.0
    %125 = vmatpush.msra.mxu0 0.0
    %126 = vmatpush.msra.mxu0 0.0
    %127 = vmatpush.msra.mxu0 0.0
    %128 = vmatpush.msra.mxu0 %v79
    %129 = vmatmul.f32.gmra.mxu0 %v111
    %v130 = vpop.f32.mrf.mxu0
    %v131 = vadd.f32 %v107, %v130
    %132 = vdwg.mxu0
    %133 = vmatpush.msra.mxu0 0.0
    %134 = vmatpush.msra.mxu0 0.0
    %135 = vmatpush.msra.mxu0 0.0
    %136 = vmatpush.msra.mxu0 0.0
    %137 = vmatpush.msra.mxu0 0.0
    %138 = vmatpush.msra.mxu0 0.0
    %139 = vmatpush.msra.mxu0 0.0
    %140 = vmatpush.msra.mxu0 0.0
    %141 = vmatpush.msra.mxu0 0.0
    %142 = vmatpush.msra.mxu0 0.0
    %143 = vmatpush.msra.mxu0 0.0
    %144 = vmatpush.msra.mxu0 0.0
    %145 = vmatpush.msra.mxu0 0.0
    %146 = vmatpush.msra.mxu0 0.0
    %147 = vmatpush.msra.mxu0 0.0
    %148 = vmatpush.msra.mxu0 %v99
    %149 = vmatmul.f32.gmra.mxu0 %v111
    %v150 = vpop.f32.mrf.mxu0
    %v151 = vadd.f32 %v107, %v150
    %152 = vdwg.mxu0
    %s153 = scalar_lea.vmem %s2, 8
    %v154 = vld [vmem:[%s153] sm:$0xff]
    %s155 = scalar_lea.vmem %s7, 16
    %v156 = vld [vmem:[%s155] sm:$0xff]
    %158 = vset.pattern.permute.xlu0 0
    %159 = vperm.xlu0 %158, %v156
    %v160 = vpop.permute.xlu0 %159
    %v163 = vsel %vm109, %v154, 0
    %165 = vmatpush.msra.mxu0 0.0
    %166 = vmatpush.msra.mxu0 0.0
    %167 = vmatpush.msra.mxu0 0.0
    %168 = vmatpush.msra.mxu0 0.0
    %169 = vmatpush.msra.mxu0 0.0
    %170 = vmatpush.msra.mxu0 0.0
    %171 = vmatpush.msra.mxu0 0.0
    %172 = vmatpush.msra.mxu0 0.0
    %173 = vmatpush.msra.mxu0 0.0
    %174 = vmatpush.msra.mxu0 0.0
    %175 = vmatpush.msra.mxu0 0.0
    %176 = vmatpush.msra.mxu0 0.0
    %177 = vmatpush.msra.mxu0 0.0
    %178 = vmatpush.msra.mxu0 0.0
    %179 = vmatpush.msra.mxu0 0.0
    %180 = vmatpush.msra.mxu0 %v131
    %181 = vmatmul.f32.gmra.mxu0 %v163
    %v182 = vpop.f32.mrf.mxu0
    %v183 = vadd.f32 %v160, %v182
    %184 = vdwg.mxu0
    %185 = vmatpush.msra.mxu0 0.0
    %186 = vmatpush.msra.mxu0 0.0
    %187 = vmatpush.msra.mxu0 0.0
    %188 = vmatpush.msra.mxu0 0.0
    %189 = vmatpush.msra.mxu0 0.0
    %190 = vmatpush.msra.mxu0 0.0
    %191 = vmatpush.msra.mxu0 0.0
    %192 = vmatpush.msra.mxu0 0.0
    %193 = vmatpush.msra.mxu0 0.0
    %194 = vmatpush.msra.mxu0 0.0
    %195 = vmatpush.msra.mxu0 0.0
    %196 = vmatpush.msra.mxu0 0.0
    %197 = vmatpush.msra.mxu0 0.0
    %198 = vmatpush.msra.mxu0 0.0
    %199 = vmatpush.msra.mxu0 0.0
    %200 = vmatpush.msra.mxu0 %v151
    %201 = vmatmul.f32.gmra.mxu0 %v163
    %v202 = vpop.f32.mrf.mxu0
    %v203 = vadd.f32 %v160, %v202
    %204 = vdwg.mxu0
    %s205 = scalar_lea.vmem %s2, 16
    %v206 = vld [vmem:[%s205] sm:$0xff]
    %s207 = scalar_lea.vmem %s7, 24
    %v208 = vld [vmem:[%s207] sm:$0xff]
    %210 = vset.pattern.permute.xlu0 0
    %211 = vperm.xlu0 %210, %v208
    %v212 = vpop.permute.xlu0 %211
    %v215 = vsel %vm109, %v206, 0
    %217 = vmatpush.msra.mxu0 0.0
    %218 = vmatpush.msra.mxu0 0.0
    %219 = vmatpush.msra.mxu0 0.0
    %220 = vmatpush.msra.mxu0 0.0
    %221 = vmatpush.msra.mxu0 0.0
    %222 = vmatpush.msra.mxu0 0.0
    %223 = vmatpush.msra.mxu0 0.0
    %224 = vmatpush.msra.mxu0 0.0
    %225 = vmatpush.msra.mxu0 0.0
    %226 = vmatpush.msra.mxu0 0.0
    %227 = vmatpush.msra.mxu0 0.0
    %228 = vmatpush.msra.mxu0 0.0
    %229 = vmatpush.msra.mxu0 0.0
    %230 = vmatpush.msra.mxu0 0.0
    %231 = vmatpush.msra.mxu0 0.0
    %232 = vmatpush.msra.mxu0 %v183
    %233 = vmatmul.f32.gmra.mxu0 %v215
    %v234 = vpop.f32.mrf.mxu0
    %v235 = vadd.f32 %v212, %v234
    %236 = vdwg.mxu0
    %237 = vmatpush.msra.mxu0 0.0
    %238 = vmatpush.msra.mxu0 0.0
    %239 = vmatpush.msra.mxu0 0.0
    %240 = vmatpush.msra.mxu0 0.0
    %241 = vmatpush.msra.mxu0 0.0
    %242 = vmatpush.msra.mxu0 0.0
    %243 = vmatpush.msra.mxu0 0.0
    %244 = vmatpush.msra.mxu0 0.0
    %245 = vmatpush.msra.mxu0 0.0
    %246 = vmatpush.msra.mxu0 0.0
    %247 = vmatpush.msra.mxu0 0.0
    %248 = vmatpush.msra.mxu0 0.0
    %249 = vmatpush.msra.mxu0 0.0
    %250 = vmatpush.msra.mxu0 0.0
    %251 = vmatpush.msra.mxu0 0.0
    %252 = vmatpush.msra.mxu0 %v203
    %253 = vmatmul.f32.gmra.mxu0 %v215
    %v254 = vpop.f32.mrf.mxu0
    %v255 = vadd.f32 %v212, %v254
    %256 = vdwg.mxu0
    %v257 = vld [vmem:[%s10] sm:$0xff]
    %v258 = vld [vmem:[%s10 + $0x8] sm:$0xff]
    %v259 = vld [vmem:[%s10 + $0x10] sm:$0xff]
    %v260 = vld [vmem:[%s10 + $0x18] sm:$0xff]
    %s261 = scalar_lea.vmem %s10, 32
    %v262 = vld [vmem:[%s261] sm:$0xff]
    %v263 = vld [vmem:[%s261 + $0x8] sm:$0xff]
    %v264 = vld [vmem:[%s261 + $0x10] sm:$0xff]
    %v265 = vld [vmem:[%s261 + $0x18] sm:$0xff]
    %266 = vadd.xlane.f32.xlu0 %v79
    %v267 = vpop.xlane.xlu0 %266
    %268 = vadd.xlane.f32.xlu0 %v131
    %v269 = vpop.xlane.xlu0 %268
    %270 = vadd.xlane.f32.xlu0 %v183
    %v271 = vpop.xlane.xlu0 %270
    %272 = vadd.xlane.f32.xlu0 %v235
    %v273 = vpop.xlane.xlu0 %272
    %274 = vadd.xlane.f32.xlu0 %v99
    %v275 = vpop.xlane.xlu0 %274
    %276 = vadd.xlane.f32.xlu0 %v151
    %v277 = vpop.xlane.xlu0 %276
    %278 = vadd.xlane.f32.xlu0 %v203
    %v279 = vpop.xlane.xlu0 %278
    %280 = vadd.xlane.f32.xlu0 %v255
    %v281 = vpop.xlane.xlu0 %280
    %v282 = vrcp.pop 128.0
    %v283 = vmul.f32 128.0, %v282
    %v284 = vsub.f32 1.0, %v283
    %v285 = vmul.f32 %v282, %v284
    %v286 = vadd.f32 %v282, %v285
    %vm287 = vweird.f32 %v282
    %v288 = vsel %vm287, %v282, %v286
    %v289 = vmul.f32 %v267, %v288
    %v290 = vmul.f32 %v269, %v288
    %v291 = vmul.f32 %v271, %v288
    %v292 = vmul.f32 %v273, %v288
    %v293 = vmul.f32 %v275, %v288
    %v294 = vmul.f32 %v277, %v288
    %v295 = vmul.f32 %v279, %v288
    %v296 = vmul.f32 %v281, %v288
    %v297 = vsub.f32 %v79, %v289
    %v298 = vsub.f32 %v131, %v290
    %v299 = vsub.f32 %v183, %v291
    %v300 = vsub.f32 %v235, %v292
    %v301 = vsub.f32 %v99, %v293
    %v302 = vsub.f32 %v151, %v294
    %v303 = vsub.f32 %v203, %v295
    %v304 = vsub.f32 %v255, %v296
    %v305 = vmul.f32 %v297, %v297
    %v306 = vmul.f32 %v298, %v298
    %v307 = vmul.f32 %v299, %v299
    %v308 = vmul.f32 %v300, %v300
    %v309 = vmul.f32 %v301, %v301
    %v310 = vmul.f32 %v302, %v302
    %v311 = vmul.f32 %v303, %v303
    %v312 = vmul.f32 %v304, %v304
    %313 = vadd.xlane.f32.xlu0 %v305
    %v314 = vpop.xlane.xlu0 %313
    %315 = vadd.xlane.f32.xlu0 %v306
    %v316 = vpop.xlane.xlu0 %315
    %317 = vadd.xlane.f32.xlu0 %v307
    %v318 = vpop.xlane.xlu0 %317
    %319 = vadd.xlane.f32.xlu0 %v308
    %v320 = vpop.xlane.xlu0 %319
    %321 = vadd.xlane.f32.xlu0 %v309
    %v322 = vpop.xlane.xlu0 %321
    %323 = vadd.xlane.f32.xlu0 %v310
    %v324 = vpop.xlane.xlu0 %323
    %325 = vadd.xlane.f32.xlu0 %v311
    %v326 = vpop.xlane.xlu0 %325
    %327 = vadd.xlane.f32.xlu0 %v312
    %v328 = vpop.xlane.xlu0 %327
    %v329 = vmul.f32 %v314, %v288
    %v330 = vmul.f32 %v316, %v288
    %v331 = vmul.f32 %v318, %v288
    %v332 = vmul.f32 %v320, %v288
    %v333 = vmul.f32 %v322, %v288
    %v334 = vmul.f32 %v324, %v288
    %v335 = vmul.f32 %v326, %v288
    %v336 = vmul.f32 %v328, %v288
    %v337 = vadd.f32 %v329, 0.001
    %v338 = vadd.f32 %v330, 0.001
    %v339 = vadd.f32 %v331, 0.001
    %v340 = vadd.f32 %v332, 0.001
    %v341 = vadd.f32 %v333, 0.001
    %v342 = vadd.f32 %v334, 0.001
    %v343 = vadd.f32 %v335, 0.001
    %v344 = vadd.f32 %v336, 0.001
    %v345 = vrsqrt.pop %v337
    %v346 = vmul.f32 %v345, %v337
    %v347 = vmul.f32 %v346, %v345
    %v348 = vmul.f32 0.5, %v347
    %v349 = vsub.f32 1.5, %v348
    %v350 = vmul.f32 %v345, %v349
    %vm351 = vweird.f32 %v337
    %vm352 = vweird.f32 %v345
    %vm353 = vmor %vm351, %vm352
    %v354 = vsel %vm353, %v345, %v350
    %v355 = vrsqrt.pop %v338
    %v356 = vmul.f32 %v355, %v338
    %v357 = vmul.f32 %v356, %v355
    %v358 = vmul.f32 0.5, %v357
    %v359 = vsub.f32 1.5, %v358
    %v360 = vmul.f32 %v355, %v359
    %vm361 = vweird.f32 %v338
    %vm362 = vweird.f32 %v355
    %vm363 = vmor %vm361, %vm362
    %v364 = vsel %vm363, %v355, %v360
    %v365 = vrsqrt.pop %v339
    %v366 = vmul.f32 %v365, %v339
    %v367 = vmul.f32 %v366, %v365
    %v368 = vmul.f32 0.5, %v367
    %v369 = vsub.f32 1.5, %v368
    %v370 = vmul.f32 %v365, %v369
    %vm371 = vweird.f32 %v339
    %vm372 = vweird.f32 %v365
    %vm373 = vmor %vm371, %vm372
    %v374 = vsel %vm373, %v365, %v370
    %v375 = vrsqrt.pop %v340
    %v376 = vmul.f32 %v375, %v340
    %v377 = vmul.f32 %v376, %v375
    %v378 = vmul.f32 0.5, %v377
    %v379 = vsub.f32 1.5, %v378
    %v380 = vmul.f32 %v375, %v379
    %vm381 = vweird.f32 %v340
    %vm382 = vweird.f32 %v375
    %vm383 = vmor %vm381, %vm382
    %v384 = vsel %vm383, %v375, %v380
    %v385 = vrsqrt.pop %v341
    %v386 = vmul.f32 %v385, %v341
    %v387 = vmul.f32 %v386, %v385
    %v388 = vmul.f32 0.5, %v387
    %v389 = vsub.f32 1.5, %v388
    %v390 = vmul.f32 %v385, %v389
    %vm391 = vweird.f32 %v341
    %vm392 = vweird.f32 %v385
    %vm393 = vmor %vm391, %vm392
    %v394 = vsel %vm393, %v385, %v390
    %v395 = vrsqrt.pop %v342
    %v396 = vmul.f32 %v395, %v342
    %v397 = vmul.f32 %v396, %v395
    %v398 = vmul.f32 0.5, %v397
    %v399 = vsub.f32 1.5, %v398
    %v400 = vmul.f32 %v395, %v399
    %vm401 = vweird.f32 %v342
    %vm402 = vweird.f32 %v395
    %vm403 = vmor %vm401, %vm402
    %v404 = vsel %vm403, %v395, %v400
    %v405 = vrsqrt.pop %v343
    %v406 = vmul.f32 %v405, %v343
    %v407 = vmul.f32 %v406, %v405
    %v408 = vmul.f32 0.5, %v407
    %v409 = vsub.f32 1.5, %v408
    %v410 = vmul.f32 %v405, %v409
    %vm411 = vweird.f32 %v343
    %vm412 = vweird.f32 %v405
    %vm413 = vmor %vm411, %vm412
    %v414 = vsel %vm413, %v405, %v410
    %v415 = vrsqrt.pop %v344
    %v416 = vmul.f32 %v415, %v344
    %v417 = vmul.f32 %v416, %v415
    %v418 = vmul.f32 0.5, %v417
    %v419 = vsub.f32 1.5, %v418
    %v420 = vmul.f32 %v415, %v419
    %vm421 = vweird.f32 %v344
    %vm422 = vweird.f32 %v415
    %vm423 = vmor %vm421, %vm422
    %v424 = vsel %vm423, %v415, %v420
    %v425 = vmul.f32 %v329, %v354
    %v426 = vmul.f32 %v330, %v364
    %v427 = vmul.f32 %v331, %v374
    %v428 = vmul.f32 %v332, %v384
    %v429 = vmul.f32 %v333, %v394
    %v430 = vmul.f32 %v334, %v404
    %v431 = vmul.f32 %v335, %v414
    %v432 = vmul.f32 %v336, %v424
    %v433 = vmul.f32 %v425, %v354
    %v434 = vmul.f32 %v426, %v364
    %v435 = vmul.f32 %v427, %v374
    %v436 = vmul.f32 %v428, %v384
    %v437 = vmul.f32 %v429, %v394
    %v438 = vmul.f32 %v430, %v404
    %v439 = vmul.f32 %v431, %v414
    %v440 = vmul.f32 %v432, %v424
    %v441 = vadd.f32 %v433, %v437
    %v442 = vadd.f32 %v434, %v438
    %v443 = vadd.f32 %v435, %v439
    %v444 = vadd.f32 %v436, %v440
    %v445 = vrcp.pop 2.0
    %v446 = vmul.f32 2.0, %v445
    %v447 = vsub.f32 1.0, %v446
    %v448 = vmul.f32 %v445, %v447
    %v449 = vadd.f32 %v445, %v448
    %vm450 = vweird.f32 %v445
    %v451 = vsel %vm450, %v445, %v449
    %v452 = vmul.f32 %v441, %v451
    %v453 = vmul.f32 %v442, %v451
    %v454 = vmul.f32 %v443, %v451
    %v455 = vmul.f32 %v444, %v451
    %v456 = vadd.f32 %v452, 1e-05
    %v457 = vadd.f32 %v453, 1e-05
    %v458 = vadd.f32 %v454, 1e-05
    %v459 = vadd.f32 %v455, 1e-05
    %v460 = vrsqrt.pop %v456
    %v461 = vmul.f32 %v460, %v456
    %v462 = vmul.f32 %v461, %v460
    %v463 = vmul.f32 0.5, %v462
    %v464 = vsub.f32 1.5, %v463
    %v465 = vmul.f32 %v460, %v464
    %vm466 = vweird.f32 %v456
    %vm467 = vweird.f32 %v460
    %vm468 = vmor %vm466, %vm467
    %v469 = vsel %vm468, %v460, %v465
    %v470 = vrsqrt.pop %v457
    %v471 = vmul.f32 %v470, %v457
    %v472 = vmul.f32 %v471, %v470
    %v473 = vmul.f32 0.5, %v472
    %v474 = vsub.f32 1.5, %v473
    %v475 = vmul.f32 %v470, %v474
    %vm476 = vweird.f32 %v457
    %vm477 = vweird.f32 %v470
    %vm478 = vmor %vm476, %vm477
    %v479 = vsel %vm478, %v470, %v475
    %v480 = vrsqrt.pop %v458
    %v481 = vmul.f32 %v480, %v458
    %v482 = vmul.f32 %v481, %v480
    %v483 = vmul.f32 0.5, %v482
    %v484 = vsub.f32 1.5, %v483
    %v485 = vmul.f32 %v480, %v484
    %vm486 = vweird.f32 %v458
    %vm487 = vweird.f32 %v480
    %vm488 = vmor %vm486, %vm487
    %v489 = vsel %vm488, %v480, %v485
    %v490 = vrsqrt.pop %v459
    %v491 = vmul.f32 %v490, %v459
    %v492 = vmul.f32 %v491, %v490
    %v493 = vmul.f32 0.5, %v492
    %v494 = vsub.f32 1.5, %v493
    %v495 = vmul.f32 %v490, %v494
    %vm496 = vweird.f32 %v459
    %vm497 = vweird.f32 %v490
    %vm498 = vmor %vm496, %vm497
    %v499 = vsel %vm498, %v490, %v495
    %v500 = vmul.f32 %v354, %v469
    %v501 = vmul.f32 %v364, %v479
    %v502 = vmul.f32 %v374, %v489
    %v503 = vmul.f32 %v384, %v499
    %v504 = vmul.f32 %v394, %v469
    %v505 = vmul.f32 %v404, %v479
    %v506 = vmul.f32 %v414, %v489
    %v507 = vmul.f32 %v424, %v499
    %v508 = vmul.f32 %v500, %v257
    %v509 = vmul.f32 %v501, %v258
    %v510 = vmul.f32 %v502, %v259
    %v511 = vmul.f32 %v503, %v260
    %v512 = vmul.f32 %v504, %v257
    %v513 = vmul.f32 %v505, %v258
    %v514 = vmul.f32 %v506, %v259
    %v515 = vmul.f32 %v507, %v260
    %517 = vset.pattern.permute.xlu0 0
    %518 = vperm.xlu0 %517, %v508
    %v519 = vpop.permute.xlu0 %518
    %522 = vset.pattern.permute.xlu0 0
    %523 = vperm.xlu0 %522, %v509
    %v524 = vpop.permute.xlu0 %523
    %527 = vset.pattern.permute.xlu0 0
    %528 = vperm.xlu0 %527, %v510
    %v529 = vpop.permute.xlu0 %528
    %532 = vset.pattern.permute.xlu0 0
    %533 = vperm.xlu0 %532, %v511
    %v534 = vpop.permute.xlu0 %533
    %537 = vset.pattern.permute.xlu0 0
    %538 = vperm.xlu0 %537, %v512
    %v539 = vpop.permute.xlu0 %538
    %542 = vset.pattern.permute.xlu0 0
    %543 = vperm.xlu0 %542, %v513
    %v544 = vpop.permute.xlu0 %543
    %547 = vset.pattern.permute.xlu0 0
    %548 = vperm.xlu0 %547, %v514
    %v549 = vpop.permute.xlu0 %548
    %552 = vset.pattern.permute.xlu0 0
    %553 = vperm.xlu0 %552, %v515
    %v554 = vpop.permute.xlu0 %553
    %v556 = vmul.f32 %v297, %v519
    %v557 = vmul.f32 %v298, %v524
    %v558 = vmul.f32 %v299, %v529
    %v559 = vmul.f32 %v300, %v534
    %v560 = vmul.f32 %v301, %v539
    %v561 = vmul.f32 %v302, %v544
    %v562 = vmul.f32 %v303, %v549
    %v563 = vmul.f32 %v304, %v554
    %565 = vset.pattern.permute.xlu0 0
    %566 = vperm.xlu0 %565, %v262
    %v567 = vpop.permute.xlu0 %566
    %570 = vset.pattern.permute.xlu0 0
    %571 = vperm.xlu0 %570, %v263
    %v572 = vpop.permute.xlu0 %571
    %575 = vset.pattern.permute.xlu0 0
    %576 = vperm.xlu0 %575, %v264
    %v577 = vpop.permute.xlu0 %576
    %580 = vset.pattern.permute.xlu0 0
    %581 = vperm.xlu0 %580, %v265
    %v582 = vpop.permute.xlu0 %581
    %v584 = vadd.f32 %v556, %v567
    %v585 = vadd.f32 %v557, %v572
    %v586 = vadd.f32 %v558, %v577
    %v587 = vadd.f32 %v559, %v582
    %v588 = vadd.f32 %v560, %v567
    %v589 = vadd.f32 %v561, %v572
    %v590 = vadd.f32 %v562, %v577
    %v591 = vadd.f32 %v563, %v582
    %v592 = vmax.f32 %v584, 0.0
    %v593 = vmax.f32 %v585, 0.0
    %v594 = vmax.f32 %v586, 0.0
    %v595 = vmax.f32 %v587, 0.0
    %v596 = vmax.f32 %v588, 0.0
    %v597 = vmax.f32 %v589, 0.0
    %v598 = vmax.f32 %v590, 0.0
    %v599 = vmax.f32 %v591, 0.0
    %v600 = vld [vmem:[%s5] sm:$0xff]
    %v601 = vld [vmem:[%s5 + $0x8] sm:$0xff]
    %v602 = vld [vmem:[%s5 + $0x10] sm:$0xff]
    %v603 = vld [vmem:[%s5 + $0x18] sm:$0xff]
    %v604 = vld [vmem:[%s5 + $0x20] sm:$0xff]
    %v605 = vld [vmem:[%s5 + $0x28] sm:$0xff]
    %v606 = vld [vmem:[%s5 + $0x30] sm:$0xff]
    %v607 = vld [vmem:[%s5 + $0x38] sm:$0xff]
    %v608 = vld [vmem:[%s5 + $0x40] sm:$0xff]
    %v609 = vld [vmem:[%s5 + $0x48] sm:$0xff]
    %v610 = vld [vmem:[%s5 + $0x50] sm:$0xff]
    %v611 = vld [vmem:[%s5 + $0x58] sm:$0xff]
    %v612 = vld [vmem:[%s5 + $0x60] sm:$0xff]
    %v613 = vld [vmem:[%s5 + $0x68] sm:$0xff]
    %v614 = vld [vmem:[%s5 + $0x70] sm:$0xff]
    %v615 = vld [vmem:[%s5 + $0x78] sm:$0xff]
    %v616 = vld [vmem:[%s9] sm:$0x1]
    %v618 = vperm.slane %v616, 0
    %620 = vmatpush.msra.mxu0 %v615
    %621 = vmatpush.msra.mxu0 %v614
    %622 = vmatpush.msra.mxu0 %v613
    %623 = vmatpush.msra.mxu0 %v612
    %624 = vmatpush.msra.mxu0 %v611
    %625 = vmatpush.msra.mxu0 %v610
    %626 = vmatpush.msra.mxu0 %v609
    %627 = vmatpush.msra.mxu0 %v608
    %628 = vmatpush.msra.mxu0 %v607
    %629 = vmatpush.msra.mxu0 %v606
    %630 = vmatpush.msra.mxu0 %v605
    %631 = vmatpush.msra.mxu0 %v604
    %632 = vmatpush.msra.mxu0 %v603
    %633 = vmatpush.msra.mxu0 %v602
    %634 = vmatpush.msra.mxu0 %v601
    %635 = vmatpush.msra.mxu0 %v600
    %636 = vmatmul.f32.gmra.mxu0 %v592
    %v637 = vpop.f32.mrf.mxu0
    %v638 = vadd.f32 %v618, %v637
    %639 = vmatmul.f32.gmra.mxu0 %v593
    %v640 = vpop.f32.mrf.mxu0
    %v641 = vadd.f32 %v618, %v640
    %642 = vmatmul.f32.gmra.mxu0 %v594
    %v643 = vpop.f32.mrf.mxu0
    %v644 = vadd.f32 %v618, %v643
    %645 = vmatmul.f32.gmra.mxu0 %v595
    %v646 = vpop.f32.mrf.mxu0
    %v647 = vadd.f32 %v618, %v646
    %648 = vmatmul.f32.gmra.mxu0 %v596
    %v649 = vpop.f32.mrf.mxu0
    %v650 = vadd.f32 %v618, %v649
    %651 = vmatmul.f32.gmra.mxu0 %v597
    %v652 = vpop.f32.mrf.mxu0
    %v653 = vadd.f32 %v618, %v652
    %654 = vmatmul.f32.gmra.mxu0 %v598
    %v655 = vpop.f32.mrf.mxu0
    %v656 = vadd.f32 %v618, %v655
    %657 = vmatmul.f32.gmra.mxu0 %v599
    %v658 = vpop.f32.mrf.mxu0
    %v659 = vadd.f32 %v618, %v658
    %660 = vdwg.mxu0
    %v661 = vld [vmem:[%s6] sm:$0xff]
    %v662 = vld [vmem:[%s6 + $0x8] sm:$0xff]
    %v663 = vld [vmem:[%s6 + $0x10] sm:$0xff]
    %v664 = vld [vmem:[%s6 + $0x18] sm:$0xff]
    %s665 = scalar_lea.vmem %s9, 1
    %v666 = vld [vmem:[%s665] sm:$0x1]
    %v668 = vperm.slane %v666, 0
    %v671 = vsel %vm57, %v638, 0
    %v674 = vsel %vm57, %v641, 0
    %v677 = vsel %vm57, %v644, 0
    %v680 = vsel %vm57, %v647, 0
    %v683 = vsel %vm57, %v650, 0
    %v686 = vsel %vm57, %v653, 0
    %v689 = vsel %vm57, %v656, 0
    %v692 = vsel %vm57, %v659, 0
    %694 = vmatpush.msra.mxu0 0.0
    %695 = vmatpush.msra.mxu0 0.0
    %696 = vmatpush.msra.mxu0 0.0
    %697 = vmatpush.msra.mxu0 0.0
    %698 = vmatpush.msra.mxu0 0.0
    %699 = vmatpush.msra.mxu0 0.0
    %700 = vmatpush.msra.mxu0 0.0
    %701 = vmatpush.msra.mxu0 0.0
    %702 = vmatpush.msra.mxu0 0.0
    %703 = vmatpush.msra.mxu0 0.0
    %704 = vmatpush.msra.mxu0 0.0
    %705 = vmatpush.msra.mxu0 0.0
    %706 = vmatpush.msra.mxu0 %v664
    %707 = vmatpush.msra.mxu0 %v663
    %708 = vmatpush.msra.mxu0 %v662
    %709 = vmatpush.msra.mxu0 %v661
    %710 = vmatmul.f32.gmra.mxu0 %v671
    %v711 = vpop.f32.mrf.mxu0
    %v712 = vadd.f32 %v668, %v711
    %713 = vmatmul.f32.gmra.mxu0 %v674
    %v714 = vpop.f32.mrf.mxu0
    %v715 = vadd.f32 %v668, %v714
    %716 = vmatmul.f32.gmra.mxu0 %v677
    %v717 = vpop.f32.mrf.mxu0
    %v718 = vadd.f32 %v668, %v717
    %719 = vmatmul.f32.gmra.mxu0 %v680
    %v720 = vpop.f32.mrf.mxu0
    %v721 = vadd.f32 %v668, %v720
    %722 = vmatmul.f32.gmra.mxu0 %v683
    %v723 = vpop.f32.mrf.mxu0
    %v724 = vadd.f32 %v668, %v723
    %725 = vmatmul.f32.gmra.mxu0 %v686
    %v726 = vpop.f32.mrf.mxu0
    %v727 = vadd.f32 %v668, %v726
    %728 = vmatmul.f32.gmra.mxu0 %v689
    %v729 = vpop.f32.mrf.mxu0
    %v730 = vadd.f32 %v668, %v729
    %731 = vmatmul.f32.gmra.mxu0 %v692
    %v732 = vpop.f32.mrf.mxu0
    %v733 = vadd.f32 %v668, %v732
    %734 = vdwg.mxu0
    %s735 = scalar_lea.vmem %s6, 32
    %v736 = vld [vmem:[%s735] sm:$0xff]
    %v737 = vld [vmem:[%s735 + $0x8] sm:$0xff]
    %v738 = vld [vmem:[%s735 + $0x10] sm:$0xff]
    %v739 = vld [vmem:[%s735 + $0x18] sm:$0xff]
    %s740 = scalar_lea.vmem %s9, 2
    %v741 = vld [vmem:[%s740] sm:$0x1]
    %v743 = vperm.slane %v741, 0
    %v746 = vsel %vm57, %v712, 0
    %v749 = vsel %vm57, %v715, 0
    %v752 = vsel %vm57, %v718, 0
    %v755 = vsel %vm57, %v721, 0
    %v758 = vsel %vm57, %v724, 0
    %v761 = vsel %vm57, %v727, 0
    %v764 = vsel %vm57, %v730, 0
    %v767 = vsel %vm57, %v733, 0
    %769 = vmatpush.msra.mxu0 0.0
    %770 = vmatpush.msra.mxu0 0.0
    %771 = vmatpush.msra.mxu0 0.0
    %772 = vmatpush.msra.mxu0 0.0
    %773 = vmatpush.msra.mxu0 0.0
    %774 = vmatpush.msra.mxu0 0.0
    %775 = vmatpush.msra.mxu0 0.0
    %776 = vmatpush.msra.mxu0 0.0
    %777 = vmatpush.msra.mxu0 0.0
    %778 = vmatpush.msra.mxu0 0.0
    %779 = vmatpush.msra.mxu0 0.0
    %780 = vmatpush.msra.mxu0 0.0
    %781 = vmatpush.msra.mxu0 %v739
    %782 = vmatpush.msra.mxu0 %v738
    %783 = vmatpush.msra.mxu0 %v737
    %784 = vmatpush.msra.mxu0 %v736
    %785 = vmatmul.f32.gmra.mxu0 %v746
    %v786 = vpop.f32.mrf.mxu0
    %v787 = vadd.f32 %v743, %v786
    %788 = vmatmul.f32.gmra.mxu0 %v749
    %v789 = vpop.f32.mrf.mxu0
    %v790 = vadd.f32 %v743, %v789
    %791 = vmatmul.f32.gmra.mxu0 %v752
    %v792 = vpop.f32.mrf.mxu0
    %v793 = vadd.f32 %v743, %v792
    %794 = vmatmul.f32.gmra.mxu0 %v755
    %v795 = vpop.f32.mrf.mxu0
    %v796 = vadd.f32 %v743, %v795
    %797 = vmatmul.f32.gmra.mxu0 %v758
    %v798 = vpop.f32.mrf.mxu0
    %v799 = vadd.f32 %v743, %v798
    %800 = vmatmul.f32.gmra.mxu0 %v761
    %v801 = vpop.f32.mrf.mxu0
    %v802 = vadd.f32 %v743, %v801
    %803 = vmatmul.f32.gmra.mxu0 %v764
    %v804 = vpop.f32.mrf.mxu0
    %v805 = vadd.f32 %v743, %v804
    %806 = vmatmul.f32.gmra.mxu0 %v767
    %v807 = vpop.f32.mrf.mxu0
    %v808 = vadd.f32 %v743, %v807
    %809 = vdwg.mxu0
    %s810 = scalar_lea.vmem %s6, 64
    %v811 = vld [vmem:[%s810] sm:$0xff]
    %v812 = vld [vmem:[%s810 + $0x8] sm:$0xff]
    %v813 = vld [vmem:[%s810 + $0x10] sm:$0xff]
    %v814 = vld [vmem:[%s810 + $0x18] sm:$0xff]
    %s815 = scalar_lea.vmem %s9, 3
    %v816 = vld [vmem:[%s815] sm:$0x1]
    %v818 = vperm.slane %v816, 0
    %v821 = vsel %vm57, %v787, 0
    %v824 = vsel %vm57, %v790, 0
    %v827 = vsel %vm57, %v793, 0
    %v830 = vsel %vm57, %v796, 0
    %v833 = vsel %vm57, %v799, 0
    %v836 = vsel %vm57, %v802, 0
    %v839 = vsel %vm57, %v805, 0
    %v842 = vsel %vm57, %v808, 0
    %844 = vmatpush.msra.mxu0 0.0
    %845 = vmatpush.msra.mxu0 0.0
    %846 = vmatpush.msra.mxu0 0.0
    %847 = vmatpush.msra.mxu0 0.0
    %848 = vmatpush.msra.mxu0 0.0
    %849 = vmatpush.msra.mxu0 0.0
    %850 = vmatpush.msra.mxu0 0.0
    %851 = vmatpush.msra.mxu0 0.0
    %852 = vmatpush.msra.mxu0 0.0
    %853 = vmatpush.msra.mxu0 0.0
    %854 = vmatpush.msra.mxu0 0.0
    %855 = vmatpush.msra.mxu0 0.0
    %856 = vmatpush.msra.mxu0 %v814
    %857 = vmatpush.msra.mxu0 %v813
    %858 = vmatpush.msra.mxu0 %v812
    %859 = vmatpush.msra.mxu0 %v811
    %860 = vmatmul.f32.gmra.mxu0 %v821
    %v861 = vpop.f32.mrf.mxu0
    %v862 = vadd.f32 %v818, %v861
    %863 = vmatmul.f32.gmra.mxu0 %v824
    %v864 = vpop.f32.mrf.mxu0
    %v865 = vadd.f32 %v818, %v864
    %866 = vmatmul.f32.gmra.mxu0 %v827
    %v867 = vpop.f32.mrf.mxu0
    %v868 = vadd.f32 %v818, %v867
    %869 = vmatmul.f32.gmra.mxu0 %v830
    %v870 = vpop.f32.mrf.mxu0
    %v871 = vadd.f32 %v818, %v870
    %872 = vmatmul.f32.gmra.mxu0 %v833
    %v873 = vpop.f32.mrf.mxu0
    %v874 = vadd.f32 %v818, %v873
    %875 = vmatmul.f32.gmra.mxu0 %v836
    %v876 = vpop.f32.mrf.mxu0
    %v877 = vadd.f32 %v818, %v876
    %878 = vmatmul.f32.gmra.mxu0 %v839
    %v879 = vpop.f32.mrf.mxu0
    %v880 = vadd.f32 %v818, %v879
    %881 = vmatmul.f32.gmra.mxu0 %v842
    %v882 = vpop.f32.mrf.mxu0
    %v883 = vadd.f32 %v818, %v882
    %884 = vdwg.mxu0
    %885 = vrot.lane.b32.xlu0 %v712, 32
    %v886 = vpop.permute.xlu0 %885
    %887 = vrot.lane.b32.xlu0 %v715, 32
    %v888 = vpop.permute.xlu0 %887
    %889 = vrot.lane.b32.xlu0 %v718, 32
    %v890 = vpop.permute.xlu0 %889
    %891 = vrot.lane.b32.xlu0 %v721, 32
    %v892 = vpop.permute.xlu0 %891
    %893 = vrot.lane.b32.xlu0 %v724, 32
    %v894 = vpop.permute.xlu0 %893
    %895 = vrot.lane.b32.xlu0 %v727, 32
    %v896 = vpop.permute.xlu0 %895
    %897 = vrot.lane.b32.xlu0 %v730, 32
    %v898 = vpop.permute.xlu0 %897
    %899 = vrot.lane.b32.xlu0 %v733, 32
    %v900 = vpop.permute.xlu0 %899
    %909 = vrot.lane.b32.xlu0 %v787, 64
    %v910 = vpop.permute.xlu0 %909
    %911 = vrot.lane.b32.xlu0 %v790, 64
    %v912 = vpop.permute.xlu0 %911
    %913 = vrot.lane.b32.xlu0 %v793, 64
    %v914 = vpop.permute.xlu0 %913
    %915 = vrot.lane.b32.xlu0 %v796, 64
    %v916 = vpop.permute.xlu0 %915
    %917 = vrot.lane.b32.xlu0 %v799, 64
    %v918 = vpop.permute.xlu0 %917
    %919 = vrot.lane.b32.xlu0 %v802, 64
    %v920 = vpop.permute.xlu0 %919
    %921 = vrot.lane.b32.xlu0 %v805, 64
    %v922 = vpop.permute.xlu0 %921
    %923 = vrot.lane.b32.xlu0 %v808, 64
    %v924 = vpop.permute.xlu0 %923
    %941 = vrot.lane.b32.xlu0 %v862, 96
    %v942 = vpop.permute.xlu0 %941
    %943 = vrot.lane.b32.xlu0 %v865, 96
    %v944 = vpop.permute.xlu0 %943
    %945 = vrot.lane.b32.xlu0 %v868, 96
    %v946 = vpop.permute.xlu0 %945
    %947 = vrot.lane.b32.xlu0 %v871, 96
    %v948 = vpop.permute.xlu0 %947
    %949 = vrot.lane.b32.xlu0 %v874, 96
    %v950 = vpop.permute.xlu0 %949
    %951 = vrot.lane.b32.xlu0 %v877, 96
    %v952 = vpop.permute.xlu0 %951
    %953 = vrot.lane.b32.xlu0 %v880, 96
    %v954 = vpop.permute.xlu0 %953
    %955 = vrot.lane.b32.xlu0 %v883, 96
    %v956 = vpop.permute.xlu0 %955
    %v965 = vsel %vm57, %v638, %v886
    %v966 = vsel %vm57, %v641, %v888
    %v967 = vsel %vm57, %v644, %v890
    %v968 = vsel %vm57, %v647, %v892
    %v969 = vsel %vm57, %v650, %v894
    %v970 = vsel %vm57, %v653, %v896
    %v971 = vsel %vm57, %v656, %v898
    %v972 = vsel %vm57, %v659, %v900
    %vm973 = vcmask 523264
    %v974 = vsel %vm973, %v965, %v910
    %v975 = vsel %vm973, %v966, %v912
    %v976 = vsel %vm973, %v967, %v914
    %v977 = vsel %vm973, %v968, %v916
    %v978 = vsel %vm973, %v969, %v918
    %v979 = vsel %vm973, %v970, %v920
    %v980 = vsel %vm973, %v971, %v922
    %v981 = vsel %vm973, %v972, %v924
    %vm982 = vcmask 785408
    %v983 = vsel %vm982, %v974, %v942
    %v984 = vsel %vm982, %v975, %v944
    %v985 = vsel %vm982, %v976, %v946
    %v986 = vsel %vm982, %v977, %v948
    %v987 = vsel %vm982, %v978, %v950
    %v988 = vsel %vm982, %v979, %v952
    %v989 = vsel %vm982, %v980, %v954
    %v990 = vsel %vm982, %v981, %v956
    %v991 = vadd.f32 %v983, %v984
    %v992 = vadd.f32 %v991, %v985
    %v993 = vadd.f32 %v992, %v986
    %v994 = vadd.f32 %v993, %v987
    %v995 = vadd.f32 %v994, %v988
    %v996 = vadd.f32 %v995, %v989
    %v997 = vadd.f32 %v996, %v990
    %v998 = vrot.slane %v997, 4
    %v999 = vadd.f32 %v997, %v998
    %v1000 = vrot.slane %v999, 2
    %v1001 = vadd.f32 %v999, %v1000
    %v1002 = vrot.slane %v1001, 1
    %v1003 = vadd.f32 %v1001, %v1002
    %v1004 = vrcp.pop 64.0
    %v1005 = vmul.f32 64.0, %v1004
    %v1006 = vsub.f32 1.0, %v1005
    %v1007 = vmul.f32 %v1004, %v1006
    %v1008 = vadd.f32 %v1004, %v1007
    %vm1009 = vweird.f32 %v1004
    %v1010 = vsel %vm1009, %v1004, %v1008
    %v1011 = vmul.f32 %v1003, %v1010
    %v1012 = vsub.f32 %v983, %v1011
    %v1013 = vsub.f32 %v984, %v1011
    %v1014 = vsub.f32 %v985, %v1011
    %v1015 = vsub.f32 %v986, %v1011
    %v1016 = vsub.f32 %v987, %v1011
    %v1017 = vsub.f32 %v988, %v1011
    %v1018 = vsub.f32 %v989, %v1011
    %v1019 = vsub.f32 %v990, %v1011
    %v1020 = vmul.f32 %v1012, %v1012
    %v1021 = vmul.f32 %v1013, %v1013
    %v1022 = vmul.f32 %v1014, %v1014
    %v1023 = vmul.f32 %v1015, %v1015
    %v1024 = vmul.f32 %v1016, %v1016
    %v1025 = vmul.f32 %v1017, %v1017
    %v1026 = vmul.f32 %v1018, %v1018
    %v1027 = vmul.f32 %v1019, %v1019
    %v1028 = vadd.f32 %v1020, %v1021
    %v1029 = vadd.f32 %v1028, %v1022
    %v1030 = vadd.f32 %v1029, %v1023
    %v1031 = vadd.f32 %v1030, %v1024
    %v1032 = vadd.f32 %v1031, %v1025
    %v1033 = vadd.f32 %v1032, %v1026
    %v1034 = vadd.f32 %v1033, %v1027
    %v1035 = vrot.slane %v1034, 4
    %v1036 = vadd.f32 %v1034, %v1035
    %v1037 = vrot.slane %v1036, 2
    %v1038 = vadd.f32 %v1036, %v1037
    %v1039 = vrot.slane %v1038, 1
    %v1040 = vadd.f32 %v1038, %v1039
    %v1041 = vmul.f32 %v1040, %v1010
    %v1042 = vadd.f32 %v1041, 1e-05
    %v1043 = vrsqrt.pop %v1042
    %v1044 = vmul.f32 %v1043, %v1042
    %v1045 = vmul.f32 %v1044, %v1043
    %v1046 = vmul.f32 0.5, %v1045
    %v1047 = vsub.f32 1.5, %v1046
    %v1048 = vmul.f32 %v1043, %v1047
    %vm1049 = vweird.f32 %v1042
    %vm1050 = vweird.f32 %v1043
    %vm1051 = vmor %vm1049, %vm1050
    %v1052 = vsel %vm1051, %v1043, %v1048
    %v1053 = vmul.f32 %v1012, %v1052
    %v1054 = vmul.f32 %v1013, %v1052
    %v1055 = vmul.f32 %v1014, %v1052
    %v1056 = vmul.f32 %v1015, %v1052
    %v1057 = vmul.f32 %v1016, %v1052
    %v1058 = vmul.f32 %v1017, %v1052
    %v1059 = vmul.f32 %v1018, %v1052
    %v1060 = vmul.f32 %v1019, %v1052
    %v1061 = vld [vmem:[%s11] sm:$0x1]
    %v1063 = vperm.slane %v1061, 0
    %v1065 = vmul.f32 %v1053, %v1063
    %v1066 = vmul.f32 %v1054, %v1063
    %v1067 = vmul.f32 %v1055, %v1063
    %v1068 = vmul.f32 %v1056, %v1063
    %v1069 = vmul.f32 %v1057, %v1063
    %v1070 = vmul.f32 %v1058, %v1063
    %v1071 = vmul.f32 %v1059, %v1063
    %v1072 = vmul.f32 %v1060, %v1063
    %s1073 = scalar_lea.vmem %s11, 1
    %v1074 = vld [vmem:[%s1073] sm:$0x1]
    %v1076 = vperm.slane %v1074, 0
    %v1078 = vadd.f32 %v1065, %v1076
    %v1079 = vadd.f32 %v1066, %v1076
    %v1080 = vadd.f32 %v1067, %v1076
    %v1081 = vadd.f32 %v1068, %v1076
    %v1082 = vadd.f32 %v1069, %v1076
    %v1083 = vadd.f32 %v1070, %v1076
    %v1084 = vadd.f32 %v1071, %v1076
    %v1085 = vadd.f32 %v1072, %v1076
    %v1086 = vmax.f32 %v1078, 0.0
    %v1087 = vmax.f32 %v1079, 0.0
    %v1088 = vmax.f32 %v1080, 0.0
    %v1089 = vmax.f32 %v1081, 0.0
    %v1090 = vmax.f32 %v1082, 0.0
    %v1091 = vmax.f32 %v1083, 0.0
    %v1092 = vmax.f32 %v1084, 0.0
    %v1093 = vmax.f32 %v1085, 0.0
    %v1094 = vadd.f32 %v592, %v1086
    %v1095 = vadd.f32 %v593, %v1087
    %v1096 = vadd.f32 %v594, %v1088
    %v1097 = vadd.f32 %v595, %v1089
    %v1098 = vadd.f32 %v596, %v1090
    %v1099 = vadd.f32 %v597, %v1091
    %v1100 = vadd.f32 %v598, %v1092
    %v1101 = vadd.f32 %v599, %v1093
    %v1102 = vld [vmem:[%s3] sm:$0xff]
    %v1103 = vld [vmem:[%s8] sm:$0xff]
    %1105 = vset.pattern.permute.xlu0 0
    %1106 = vperm.xlu0 %1105, %v1103
    %v1107 = vpop.permute.xlu0 %1106
    %v1110 = vsel %vm57, %v1102, 0
    %1112 = vmatpush.msra.mxu0 0.0
    %1113 = vmatpush.msra.mxu0 0.0
    %1114 = vmatpush.msra.mxu0 0.0
    %1115 = vmatpush.msra.mxu0 0.0
    %1116 = vmatpush.msra.mxu0 0.0
    %1117 = vmatpush.msra.mxu0 0.0
    %1118 = vmatpush.msra.mxu0 0.0
    %1119 = vmatpush.msra.mxu0 0.0
    %1120 = vmatpush.msra.mxu0 0.0
    %1121 = vmatpush.msra.mxu0 0.0
    %1122 = vmatpush.msra.mxu0 0.0
    %1123 = vmatpush.msra.mxu0 0.0
    %1124 = vmatpush.msra.mxu0 %v1097
    %1125 = vmatpush.msra.mxu0 %v1096
    %1126 = vmatpush.msra.mxu0 %v1095
    %1127 = vmatpush.msra.mxu0 %v1094
    %1128 = vmatmul.f32.gmra.mxu0 %v1110
    %v1129 = vpop.f32.mrf.mxu0
    %v1130 = vadd.f32 %v1107, %v1129
    %1131 = vdwg.mxu0
    %1132 = vmatpush.msra.mxu0 0.0
    %1133 = vmatpush.msra.mxu0 0.0
    %1134 = vmatpush.msra.mxu0 0.0
    %1135 = vmatpush.msra.mxu0 0.0
    %1136 = vmatpush.msra.mxu0 0.0
    %1137 = vmatpush.msra.mxu0 0.0
    %1138 = vmatpush.msra.mxu0 0.0
    %1139 = vmatpush.msra.mxu0 0.0
    %1140 = vmatpush.msra.mxu0 0.0
    %1141 = vmatpush.msra.mxu0 0.0
    %1142 = vmatpush.msra.mxu0 0.0
    %1143 = vmatpush.msra.mxu0 0.0
    %1144 = vmatpush.msra.mxu0 %v1101
    %1145 = vmatpush.msra.mxu0 %v1100
    %1146 = vmatpush.msra.mxu0 %v1099
    %1147 = vmatpush.msra.mxu0 %v1098
    %1148 = vmatmul.f32.gmra.mxu0 %v1110
    %v1149 = vpop.f32.mrf.mxu0
    %v1150 = vadd.f32 %v1107, %v1149
    %1151 = vdwg.mxu0
    %v1152 = vld [vmem:[%s4] sm:$0xff]
    %s1153 = scalar_lea.vmem %s8, 8
    %v1154 = vld [vmem:[%s1153] sm:$0xff]
    %1156 = vset.pattern.permute.xlu0 0
    %1157 = vperm.xlu0 %1156, %v1154
    %v1158 = vpop.permute.xlu0 %1157
    %v1161 = vsel %vm109, %v1152, 0
    %1163 = vmatpush.msra.mxu0 0.0
    %1164 = vmatpush.msra.mxu0 0.0
    %1165 = vmatpush.msra.mxu0 0.0
    %1166 = vmatpush.msra.mxu0 0.0
    %1167 = vmatpush.msra.mxu0 0.0
    %1168 = vmatpush.msra.mxu0 0.0
    %1169 = vmatpush.msra.mxu0 0.0
    %1170 = vmatpush.msra.mxu0 0.0
    %1171 = vmatpush.msra.mxu0 0.0
    %1172 = vmatpush.msra.mxu0 0.0
    %1173 = vmatpush.msra.mxu0 0.0
    %1174 = vmatpush.msra.mxu0 0.0
    %1175 = vmatpush.msra.mxu0 0.0
    %1176 = vmatpush.msra.mxu0 0.0
    %1177 = vmatpush.msra.mxu0 0.0
    %1178 = vmatpush.msra.mxu0 %v1130
    %1179 = vmatmul.f32.gmra.mxu0 %v1161
    %v1180 = vpop.f32.mrf.mxu0
    %v1181 = vadd.f32 %v1158, %v1180
    %1182 = vdwg.mxu0
    %1183 = vmatpush.msra.mxu0 0.0
    %1184 = vmatpush.msra.mxu0 0.0
    %1185 = vmatpush.msra.mxu0 0.0
    %1186 = vmatpush.msra.mxu0 0.0
    %1187 = vmatpush.msra.mxu0 0.0
    %1188 = vmatpush.msra.mxu0 0.0
    %1189 = vmatpush.msra.mxu0 0.0
    %1190 = vmatpush.msra.mxu0 0.0
    %1191 = vmatpush.msra.mxu0 0.0
    %1192 = vmatpush.msra.mxu0 0.0
    %1193 = vmatpush.msra.mxu0 0.0
    %1194 = vmatpush.msra.mxu0 0.0
    %1195 = vmatpush.msra.mxu0 0.0
    %1196 = vmatpush.msra.mxu0 0.0
    %1197 = vmatpush.msra.mxu0 0.0
    %1198 = vmatpush.msra.mxu0 %v1150
    %1199 = vmatmul.f32.gmra.mxu0 %v1161
    %v1200 = vpop.f32.mrf.mxu0
    %v1201 = vadd.f32 %v1158, %v1200
    %1202 = vdwg.mxu0
    %s1203 = scalar_lea.vmem %s4, 8
    %v1204 = vld [vmem:[%s1203] sm:$0xff]
    %s1205 = scalar_lea.vmem %s8, 16
    %v1206 = vld [vmem:[%s1205] sm:$0xff]
    %1208 = vset.pattern.permute.xlu0 0
    %1209 = vperm.xlu0 %1208, %v1206
    %v1210 = vpop.permute.xlu0 %1209
    %v1213 = vsel %vm109, %v1204, 0
    %1215 = vmatpush.msra.mxu0 0.0
    %1216 = vmatpush.msra.mxu0 0.0
    %1217 = vmatpush.msra.mxu0 0.0
    %1218 = vmatpush.msra.mxu0 0.0
    %1219 = vmatpush.msra.mxu0 0.0
    %1220 = vmatpush.msra.mxu0 0.0
    %1221 = vmatpush.msra.mxu0 0.0
    %1222 = vmatpush.msra.mxu0 0.0
    %1223 = vmatpush.msra.mxu0 0.0
    %1224 = vmatpush.msra.mxu0 0.0
    %1225 = vmatpush.msra.mxu0 0.0
    %1226 = vmatpush.msra.mxu0 0.0
    %1227 = vmatpush.msra.mxu0 0.0
    %1228 = vmatpush.msra.mxu0 0.0
    %1229 = vmatpush.msra.mxu0 0.0
    %1230 = vmatpush.msra.mxu0 %v1181
    %1231 = vmatmul.f32.gmra.mxu0 %v1213
    %v1232 = vpop.f32.mrf.mxu0
    %v1233 = vadd.f32 %v1210, %v1232
    %1234 = vdwg.mxu0
    %1235 = vmatpush.msra.mxu0 0.0
    %1236 = vmatpush.msra.mxu0 0.0
    %1237 = vmatpush.msra.mxu0 0.0
    %1238 = vmatpush.msra.mxu0 0.0
    %1239 = vmatpush.msra.mxu0 0.0
    %1240 = vmatpush.msra.mxu0 0.0
    %1241 = vmatpush.msra.mxu0 0.0
    %1242 = vmatpush.msra.mxu0 0.0
    %1243 = vmatpush.msra.mxu0 0.0
    %1244 = vmatpush.msra.mxu0 0.0
    %1245 = vmatpush.msra.mxu0 0.0
    %1246 = vmatpush.msra.mxu0 0.0
    %1247 = vmatpush.msra.mxu0 0.0
    %1248 = vmatpush.msra.mxu0 0.0
    %1249 = vmatpush.msra.mxu0 0.0
    %1250 = vmatpush.msra.mxu0 %v1201
    %1251 = vmatmul.f32.gmra.mxu0 %v1213
    %v1252 = vpop.f32.mrf.mxu0
    %v1253 = vadd.f32 %v1210, %v1252
    %1254 = vdwg.mxu0
    %s1255 = scalar_lea.vmem %s4, 16
    %v1256 = vld [vmem:[%s1255] sm:$0xff]
    %s1257 = scalar_lea.vmem %s8, 24
    %v1258 = vld [vmem:[%s1257] sm:$0xff]
    %1260 = vset.pattern.permute.xlu0 0
    %1261 = vperm.xlu0 %1260, %v1258
    %v1262 = vpop.permute.xlu0 %1261
    %v1265 = vsel %vm109, %v1256, 0
    %1267 = vmatpush.msra.mxu0 0.0
    %1268 = vmatpush.msra.mxu0 0.0
    %1269 = vmatpush.msra.mxu0 0.0
    %1270 = vmatpush.msra.mxu0 0.0
    %1271 = vmatpush.msra.mxu0 0.0
    %1272 = vmatpush.msra.mxu0 0.0
    %1273 = vmatpush.msra.mxu0 0.0
    %1274 = vmatpush.msra.mxu0 0.0
    %1275 = vmatpush.msra.mxu0 0.0
    %1276 = vmatpush.msra.mxu0 0.0
    %1277 = vmatpush.msra.mxu0 0.0
    %1278 = vmatpush.msra.mxu0 0.0
    %1279 = vmatpush.msra.mxu0 0.0
    %1280 = vmatpush.msra.mxu0 0.0
    %1281 = vmatpush.msra.mxu0 0.0
    %1282 = vmatpush.msra.mxu0 %v1233
    %1283 = vmatmul.f32.gmra.mxu0 %v1265
    %v1284 = vpop.f32.mrf.mxu0
    %v1285 = vadd.f32 %v1262, %v1284
    %1286 = vdwg.mxu0
    %1287 = vmatpush.msra.mxu0 0.0
    %1288 = vmatpush.msra.mxu0 0.0
    %1289 = vmatpush.msra.mxu0 0.0
    %1290 = vmatpush.msra.mxu0 0.0
    %1291 = vmatpush.msra.mxu0 0.0
    %1292 = vmatpush.msra.mxu0 0.0
    %1293 = vmatpush.msra.mxu0 0.0
    %1294 = vmatpush.msra.mxu0 0.0
    %1295 = vmatpush.msra.mxu0 0.0
    %1296 = vmatpush.msra.mxu0 0.0
    %1297 = vmatpush.msra.mxu0 0.0
    %1298 = vmatpush.msra.mxu0 0.0
    %1299 = vmatpush.msra.mxu0 0.0
    %1300 = vmatpush.msra.mxu0 0.0
    %1301 = vmatpush.msra.mxu0 0.0
    %1302 = vmatpush.msra.mxu0 %v1253
    %1303 = vmatmul.f32.gmra.mxu0 %v1265
    %v1304 = vpop.f32.mrf.mxu0
    %v1305 = vadd.f32 %v1262, %v1304
    %1306 = vdwg.mxu0
    %s1307 = scalar_lea.vmem %s10, 64
    %v1308 = vld [vmem:[%s1307] sm:$0xff]
    %v1309 = vld [vmem:[%s1307 + $0x8] sm:$0xff]
    %v1310 = vld [vmem:[%s1307 + $0x10] sm:$0xff]
    %v1311 = vld [vmem:[%s1307 + $0x18] sm:$0xff]
    %s1312 = scalar_lea.vmem %s10, 96
    %v1313 = vld [vmem:[%s1312] sm:$0xff]
    %v1314 = vld [vmem:[%s1312 + $0x8] sm:$0xff]
    %v1315 = vld [vmem:[%s1312 + $0x10] sm:$0xff]
    %v1316 = vld [vmem:[%s1312 + $0x18] sm:$0xff]
    %1317 = vadd.xlane.f32.xlu0 %v1130
    %v1318 = vpop.xlane.xlu0 %1317
    %1319 = vadd.xlane.f32.xlu0 %v1181
    %v1320 = vpop.xlane.xlu0 %1319
    %1321 = vadd.xlane.f32.xlu0 %v1233
    %v1322 = vpop.xlane.xlu0 %1321
    %1323 = vadd.xlane.f32.xlu0 %v1285
    %v1324 = vpop.xlane.xlu0 %1323
    %1325 = vadd.xlane.f32.xlu0 %v1150
    %v1326 = vpop.xlane.xlu0 %1325
    %1327 = vadd.xlane.f32.xlu0 %v1201
    %v1328 = vpop.xlane.xlu0 %1327
    %1329 = vadd.xlane.f32.xlu0 %v1253
    %v1330 = vpop.xlane.xlu0 %1329
    %1331 = vadd.xlane.f32.xlu0 %v1305
    %v1332 = vpop.xlane.xlu0 %1331
    %v1333 = vmul.f32 %v1318, %v288
    %v1334 = vmul.f32 %v1320, %v288
    %v1335 = vmul.f32 %v1322, %v288
    %v1336 = vmul.f32 %v1324, %v288
    %v1337 = vmul.f32 %v1326, %v288
    %v1338 = vmul.f32 %v1328, %v288
    %v1339 = vmul.f32 %v1330, %v288
    %v1340 = vmul.f32 %v1332, %v288
    %v1341 = vsub.f32 %v1130, %v1333
    %v1342 = vsub.f32 %v1181, %v1334
    %v1343 = vsub.f32 %v1233, %v1335
    %v1344 = vsub.f32 %v1285, %v1336
    %v1345 = vsub.f32 %v1150, %v1337
    %v1346 = vsub.f32 %v1201, %v1338
    %v1347 = vsub.f32 %v1253, %v1339
    %v1348 = vsub.f32 %v1305, %v1340
    %v1349 = vmul.f32 %v1341, %v1341
    %v1350 = vmul.f32 %v1342, %v1342
    %v1351 = vmul.f32 %v1343, %v1343
    %v1352 = vmul.f32 %v1344, %v1344
    %v1353 = vmul.f32 %v1345, %v1345
    %v1354 = vmul.f32 %v1346, %v1346
    %v1355 = vmul.f32 %v1347, %v1347
    %v1356 = vmul.f32 %v1348, %v1348
    %1357 = vadd.xlane.f32.xlu0 %v1349
    %v1358 = vpop.xlane.xlu0 %1357
    %1359 = vadd.xlane.f32.xlu0 %v1350
    %v1360 = vpop.xlane.xlu0 %1359
    %1361 = vadd.xlane.f32.xlu0 %v1351
    %v1362 = vpop.xlane.xlu0 %1361
    %1363 = vadd.xlane.f32.xlu0 %v1352
    %v1364 = vpop.xlane.xlu0 %1363
    %1365 = vadd.xlane.f32.xlu0 %v1353
    %v1366 = vpop.xlane.xlu0 %1365
    %1367 = vadd.xlane.f32.xlu0 %v1354
    %v1368 = vpop.xlane.xlu0 %1367
    %1369 = vadd.xlane.f32.xlu0 %v1355
    %v1370 = vpop.xlane.xlu0 %1369
    %1371 = vadd.xlane.f32.xlu0 %v1356
    %v1372 = vpop.xlane.xlu0 %1371
    %v1373 = vmul.f32 %v1358, %v288
    %v1374 = vmul.f32 %v1360, %v288
    %v1375 = vmul.f32 %v1362, %v288
    %v1376 = vmul.f32 %v1364, %v288
    %v1377 = vmul.f32 %v1366, %v288
    %v1378 = vmul.f32 %v1368, %v288
    %v1379 = vmul.f32 %v1370, %v288
    %v1380 = vmul.f32 %v1372, %v288
    %v1381 = vadd.f32 %v1373, 0.001
    %v1382 = vadd.f32 %v1374, 0.001
    %v1383 = vadd.f32 %v1375, 0.001
    %v1384 = vadd.f32 %v1376, 0.001
    %v1385 = vadd.f32 %v1377, 0.001
    %v1386 = vadd.f32 %v1378, 0.001
    %v1387 = vadd.f32 %v1379, 0.001
    %v1388 = vadd.f32 %v1380, 0.001
    %v1389 = vrsqrt.pop %v1381
    %v1390 = vmul.f32 %v1389, %v1381
    %v1391 = vmul.f32 %v1390, %v1389
    %v1392 = vmul.f32 0.5, %v1391
    %v1393 = vsub.f32 1.5, %v1392
    %v1394 = vmul.f32 %v1389, %v1393
    %vm1395 = vweird.f32 %v1381
    %vm1396 = vweird.f32 %v1389
    %vm1397 = vmor %vm1395, %vm1396
    %v1398 = vsel %vm1397, %v1389, %v1394
    %v1399 = vrsqrt.pop %v1382
    %v1400 = vmul.f32 %v1399, %v1382
    %v1401 = vmul.f32 %v1400, %v1399
    %v1402 = vmul.f32 0.5, %v1401
    %v1403 = vsub.f32 1.5, %v1402
    %v1404 = vmul.f32 %v1399, %v1403
    %vm1405 = vweird.f32 %v1382
    %vm1406 = vweird.f32 %v1399
    %vm1407 = vmor %vm1405, %vm1406
    %v1408 = vsel %vm1407, %v1399, %v1404
    %v1409 = vrsqrt.pop %v1383
    %v1410 = vmul.f32 %v1409, %v1383
    %v1411 = vmul.f32 %v1410, %v1409
    %v1412 = vmul.f32 0.5, %v1411
    %v1413 = vsub.f32 1.5, %v1412
    %v1414 = vmul.f32 %v1409, %v1413
    %vm1415 = vweird.f32 %v1383
    %vm1416 = vweird.f32 %v1409
    %vm1417 = vmor %vm1415, %vm1416
    %v1418 = vsel %vm1417, %v1409, %v1414
    %v1419 = vrsqrt.pop %v1384
    %v1420 = vmul.f32 %v1419, %v1384
    %v1421 = vmul.f32 %v1420, %v1419
    %v1422 = vmul.f32 0.5, %v1421
    %v1423 = vsub.f32 1.5, %v1422
    %v1424 = vmul.f32 %v1419, %v1423
    %vm1425 = vweird.f32 %v1384
    %vm1426 = vweird.f32 %v1419
    %vm1427 = vmor %vm1425, %vm1426
    %v1428 = vsel %vm1427, %v1419, %v1424
    %v1429 = vrsqrt.pop %v1385
    %v1430 = vmul.f32 %v1429, %v1385
    %v1431 = vmul.f32 %v1430, %v1429
    %v1432 = vmul.f32 0.5, %v1431
    %v1433 = vsub.f32 1.5, %v1432
    %v1434 = vmul.f32 %v1429, %v1433
    %vm1435 = vweird.f32 %v1385
    %vm1436 = vweird.f32 %v1429
    %vm1437 = vmor %vm1435, %vm1436
    %v1438 = vsel %vm1437, %v1429, %v1434
    %v1439 = vrsqrt.pop %v1386
    %v1440 = vmul.f32 %v1439, %v1386
    %v1441 = vmul.f32 %v1440, %v1439
    %v1442 = vmul.f32 0.5, %v1441
    %v1443 = vsub.f32 1.5, %v1442
    %v1444 = vmul.f32 %v1439, %v1443
    %vm1445 = vweird.f32 %v1386
    %vm1446 = vweird.f32 %v1439
    %vm1447 = vmor %vm1445, %vm1446
    %v1448 = vsel %vm1447, %v1439, %v1444
    %v1449 = vrsqrt.pop %v1387
    %v1450 = vmul.f32 %v1449, %v1387
    %v1451 = vmul.f32 %v1450, %v1449
    %v1452 = vmul.f32 0.5, %v1451
    %v1453 = vsub.f32 1.5, %v1452
    %v1454 = vmul.f32 %v1449, %v1453
    %vm1455 = vweird.f32 %v1387
    %vm1456 = vweird.f32 %v1449
    %vm1457 = vmor %vm1455, %vm1456
    %v1458 = vsel %vm1457, %v1449, %v1454
    %v1459 = vrsqrt.pop %v1388
    %v1460 = vmul.f32 %v1459, %v1388
    %v1461 = vmul.f32 %v1460, %v1459
    %v1462 = vmul.f32 0.5, %v1461
    %v1463 = vsub.f32 1.5, %v1462
    %v1464 = vmul.f32 %v1459, %v1463
    %vm1465 = vweird.f32 %v1388
    %vm1466 = vweird.f32 %v1459
    %vm1467 = vmor %vm1465, %vm1466
    %v1468 = vsel %vm1467, %v1459, %v1464
    %v1469 = vmul.f32 %v1373, %v1398
    %v1470 = vmul.f32 %v1374, %v1408
    %v1471 = vmul.f32 %v1375, %v1418
    %v1472 = vmul.f32 %v1376, %v1428
    %v1473 = vmul.f32 %v1377, %v1438
    %v1474 = vmul.f32 %v1378, %v1448
    %v1475 = vmul.f32 %v1379, %v1458
    %v1476 = vmul.f32 %v1380, %v1468
    %v1477 = vmul.f32 %v1469, %v1398
    %v1478 = vmul.f32 %v1470, %v1408
    %v1479 = vmul.f32 %v1471, %v1418
    %v1480 = vmul.f32 %v1472, %v1428
    %v1481 = vmul.f32 %v1473, %v1438
    %v1482 = vmul.f32 %v1474, %v1448
    %v1483 = vmul.f32 %v1475, %v1458
    %v1484 = vmul.f32 %v1476, %v1468
    %v1485 = vadd.f32 %v1477, %v1481
    %v1486 = vadd.f32 %v1478, %v1482
    %v1487 = vadd.f32 %v1479, %v1483
    %v1488 = vadd.f32 %v1480, %v1484
    %v1489 = vmul.f32 %v1485, %v451
    %v1490 = vmul.f32 %v1486, %v451
    %v1491 = vmul.f32 %v1487, %v451
    %v1492 = vmul.f32 %v1488, %v451
    %v1493 = vadd.f32 %v1489, 1e-05
    %v1494 = vadd.f32 %v1490, 1e-05
    %v1495 = vadd.f32 %v1491, 1e-05
    %v1496 = vadd.f32 %v1492, 1e-05
    %v1497 = vrsqrt.pop %v1493
    %v1498 = vmul.f32 %v1497, %v1493
    %v1499 = vmul.f32 %v1498, %v1497
    %v1500 = vmul.f32 0.5, %v1499
    %v1501 = vsub.f32 1.5, %v1500
    %v1502 = vmul.f32 %v1497, %v1501
    %vm1503 = vweird.f32 %v1493
    %vm1504 = vweird.f32 %v1497
    %vm1505 = vmor %vm1503, %vm1504
    %v1506 = vsel %vm1505, %v1497, %v1502
    %v1507 = vrsqrt.pop %v1494
    %v1508 = vmul.f32 %v1507, %v1494
    %v1509 = vmul.f32 %v1508, %v1507
    %v1510 = vmul.f32 0.5, %v1509
    %v1511 = vsub.f32 1.5, %v1510
    %v1512 = vmul.f32 %v1507, %v1511
    %vm1513 = vweird.f32 %v1494
    %vm1514 = vweird.f32 %v1507
    %vm1515 = vmor %vm1513, %vm1514
    %v1516 = vsel %vm1515, %v1507, %v1512
    %v1517 = vrsqrt.pop %v1495
    %v1518 = vmul.f32 %v1517, %v1495
    %v1519 = vmul.f32 %v1518, %v1517
    %v1520 = vmul.f32 0.5, %v1519
    %v1521 = vsub.f32 1.5, %v1520
    %v1522 = vmul.f32 %v1517, %v1521
    %vm1523 = vweird.f32 %v1495
    %vm1524 = vweird.f32 %v1517
    %vm1525 = vmor %vm1523, %vm1524
    %v1526 = vsel %vm1525, %v1517, %v1522
    %v1527 = vrsqrt.pop %v1496
    %v1528 = vmul.f32 %v1527, %v1496
    %v1529 = vmul.f32 %v1528, %v1527
    %v1530 = vmul.f32 0.5, %v1529
    %v1531 = vsub.f32 1.5, %v1530
    %v1532 = vmul.f32 %v1527, %v1531
    %vm1533 = vweird.f32 %v1496
    %vm1534 = vweird.f32 %v1527
    %vm1535 = vmor %vm1533, %vm1534
    %v1536 = vsel %vm1535, %v1527, %v1532
    %v1537 = vmul.f32 %v1398, %v1506
    %v1538 = vmul.f32 %v1408, %v1516
    %v1539 = vmul.f32 %v1418, %v1526
    %v1540 = vmul.f32 %v1428, %v1536
    %v1541 = vmul.f32 %v1438, %v1506
    %v1542 = vmul.f32 %v1448, %v1516
    %v1543 = vmul.f32 %v1458, %v1526
    %v1544 = vmul.f32 %v1468, %v1536
    %v1545 = vmul.f32 %v1537, %v1308
    %v1546 = vmul.f32 %v1538, %v1309
    %v1547 = vmul.f32 %v1539, %v1310
    %v1548 = vmul.f32 %v1540, %v1311
    %v1549 = vmul.f32 %v1541, %v1308
    %v1550 = vmul.f32 %v1542, %v1309
    %v1551 = vmul.f32 %v1543, %v1310
    %v1552 = vmul.f32 %v1544, %v1311
    %1554 = vset.pattern.permute.xlu0 0
    %1555 = vperm.xlu0 %1554, %v1545
    %v1556 = vpop.permute.xlu0 %1555
    %1559 = vset.pattern.permute.xlu0 0
    %1560 = vperm.xlu0 %1559, %v1546
    %v1561 = vpop.permute.xlu0 %1560
    %1564 = vset.pattern.permute.xlu0 0
    %1565 = vperm.xlu0 %1564, %v1547
    %v1566 = vpop.permute.xlu0 %1565
    %1569 = vset.pattern.permute.xlu0 0
    %1570 = vperm.xlu0 %1569, %v1548
    %v1571 = vpop.permute.xlu0 %1570
    %1574 = vset.pattern.permute.xlu0 0
    %1575 = vperm.xlu0 %1574, %v1549
    %v1576 = vpop.permute.xlu0 %1575
    %1579 = vset.pattern.permute.xlu0 0
    %1580 = vperm.xlu0 %1579, %v1550
    %v1581 = vpop.permute.xlu0 %1580
    %1584 = vset.pattern.permute.xlu0 0
    %1585 = vperm.xlu0 %1584, %v1551
    %v1586 = vpop.permute.xlu0 %1585
    %1589 = vset.pattern.permute.xlu0 0
    %1590 = vperm.xlu0 %1589, %v1552
    %v1591 = vpop.permute.xlu0 %1590
    %v1593 = vmul.f32 %v1341, %v1556
    %v1594 = vmul.f32 %v1342, %v1561
    %v1595 = vmul.f32 %v1343, %v1566
    %v1596 = vmul.f32 %v1344, %v1571
    %v1597 = vmul.f32 %v1345, %v1576
    %v1598 = vmul.f32 %v1346, %v1581
    %v1599 = vmul.f32 %v1347, %v1586
    %v1600 = vmul.f32 %v1348, %v1591
    %1602 = vset.pattern.permute.xlu0 0
    %1603 = vperm.xlu0 %1602, %v1313
    %v1604 = vpop.permute.xlu0 %1603
    %1607 = vset.pattern.permute.xlu0 0
    %1608 = vperm.xlu0 %1607, %v1314
    %v1609 = vpop.permute.xlu0 %1608
    %1612 = vset.pattern.permute.xlu0 0
    %1613 = vperm.xlu0 %1612, %v1315
    %v1614 = vpop.permute.xlu0 %1613
    %1617 = vset.pattern.permute.xlu0 0
    %1618 = vperm.xlu0 %1617, %v1316
    %v1619 = vpop.permute.xlu0 %1618
    %v1621 = vadd.f32 %v1593, %v1604
    %v1622 = vadd.f32 %v1594, %v1609
    %v1623 = vadd.f32 %v1595, %v1614
    %v1624 = vadd.f32 %v1596, %v1619
    %v1625 = vadd.f32 %v1597, %v1604
    %v1626 = vadd.f32 %v1598, %v1609
    %v1627 = vadd.f32 %v1599, %v1614
    %v1628 = vadd.f32 %v1600, %v1619
    %v1629 = vmax.f32 %v1621, 0.0
    %v1630 = vmax.f32 %v1622, 0.0
    %v1631 = vmax.f32 %v1623, 0.0
    %v1632 = vmax.f32 %v1624, 0.0
    %v1633 = vmax.f32 %v1625, 0.0
    %v1634 = vmax.f32 %v1626, 0.0
    %v1635 = vmax.f32 %v1627, 0.0
    %v1636 = vmax.f32 %v1628, 0.0
    %v1637 = vadd.f32 %v1629, %v42
    %v1638 = vadd.f32 %v1630, %v43
    %v1639 = vadd.f32 %v1631, %v44
    %v1640 = vadd.f32 %v1632, %v45
    %v1641 = vadd.f32 %v1633, %v46
    %v1642 = vadd.f32 %v1634, %v47
    %v1643 = vadd.f32 %v1635, %v48
    %v1644 = vadd.f32 %v1636, %v49
    %1645 = vst [vmem:[#allocation2] sm:$0xff] %v1637
    %1646 = vst [vmem:[#allocation2 + $0x8] sm:$0xff] %v1638
    %1647 = vst [vmem:[#allocation2 + $0x10] sm:$0xff] %v1639
    %1648 = vst [vmem:[#allocation2 + $0x18] sm:$0xff] %v1640
    %1649 = vst [vmem:[#allocation2 + $0x20] sm:$0xff] %v1641
    %1650 = vst [vmem:[#allocation2 + $0x28] sm:$0xff] %v1642
    %1651 = vst [vmem:[#allocation2 + $0x30] sm:$0xff] %v1643
    %1652 = vst [vmem:[#allocation2 + $0x38] sm:$0xff] %v1644
    // Predicated region
    $region50: #{tpu_custom_call.1} parent=1 // pred_check
      _
    $region51: #{tpu_custom_call.1} parent=1 // pred_check_branch
      %1654 = sbr.rel (0) target = $region53
    $region52: #{tpu_custom_call.1} parent=1 // pred_region
      %1656 = vsyncadd [#allocation3], 0
      %s1657 = sshll.u32 [#allocation2], 4
      %s1658 = int_to_ptr.vmem [resolvable:$true] %s1657
      %s1659 = sshll.u32 %s12, 4
      %s1660 = int_to_ptr.hbm [resolvable:$true] %s1659
      %1665 = dma.vmem_to_hbm [thread:$0]  %s1658, 1024, %s1660, [#allocation3], 128, 128, 8
    $region53: #{tpu_custom_call.1} parent=1 // pred_fallthru
      _
    // Predicated region
    $region54: #{tpu_custom_call.1} parent=1 // pred_check
      _
    $region55: #{tpu_custom_call.1} parent=1 // pred_check_branch
      %1667 = sbr.rel (0) target = $region57
    $region56: #{tpu_custom_call.1} parent=1 // pred_region
      %1669 = dma.done [#allocation3], 1024
    $region57: #{tpu_custom_call.1} parent=1 // pred_fallthru
      _
    %1670 = vsyncpa [#allocation3], 1

</llo_original>
